<compile_context>
chip_gen: v7x
topology: tpu7x:2x2x1
jax: 0.10.0
libtpu: 0.0.40
codegen_flags: <defaults>
</compile_context>

<pallas_src>
import jax
import jax.numpy as jnp
from jax.experimental import pallas as pl
from jax.experimental.pallas import tpu as pltpu

D = 32                    # input feature dim (module's global `D`)
H1, H2, H3, OUT = 1024, 512, 256, 4
OUT_PAD = 128             # lane-dense padded output width


def _sigmoid_eup(h):
    # exp + approx reciprocal both use the EUP slot (free filler next to MXU).
    return pl.reciprocal(1.0 + jnp.exp(-h), approx=True)


def _mlp_kernel(x_ref, w1_ref, b1_ref, w2_ref, b2_ref,
                w3_ref, b3_ref, w4_ref, b4_ref, o_ref):
    # x_ref / w*_ref are bf16; b*_ref are f32; accumulate in f32 on the MXU.
    h = jnp.dot(x_ref[...], w1_ref[...],
                preferred_element_type=jnp.float32) + b1_ref[...]
    h = _sigmoid_eup(h)

    h = jnp.dot(h.astype(jnp.bfloat16), w2_ref[...],
                preferred_element_type=jnp.float32) + b2_ref[...]
    h = _sigmoid_eup(h)

    h = jnp.dot(h.astype(jnp.bfloat16), w3_ref[...],
                preferred_element_type=jnp.float32) + b3_ref[...]
    h = _sigmoid_eup(h)

    out = jnp.dot(h.astype(jnp.bfloat16), w4_ref[...],
                  preferred_element_type=jnp.float32) + b4_ref[...]
    o_ref[...] = out.astype(o_ref.dtype)


def _default_block_b(B):
    # Prefer ~512-row tiles (fills 128/256-wide MXU, caps VMEM, splits the grid
    # so v7x megacore sharding has work); fall back to smaller 8-multiples.
    for cand in (512, 256, 128, 64, 32, 16, 8):
        if B >= cand and B % cand == 0:
            return cand
    return B  # tiny / odd batch: single full block


def net_forward(x, params, *, block_b=None):
    """x: (B, D) float32. params: dict of w1..w4 (in,out) and b1..b4 (1,out)."""
    B, d = x.shape
    assert d == D
    if block_b is None:
        block_b = _default_block_b(B)
    assert B % block_b == 0
    # Sublane tiling rule: a partial-batch tile must be a multiple of 8.
    assert block_b == B or block_b % 8 == 0
    grid = (B // block_b,)

    # Cast once in the wrapper: HBM copies / DMAs are bf16.
    bf16 = jnp.bfloat16
    x_bf = x.astype(bf16)
    w1 = params["w1"].astype(bf16)
    w2 = params["w2"].astype(bf16)
    w3 = params["w3"].astype(bf16)
    # Pad the last layer to 128 output lanes (lane-dense stores).
    w4p = jnp.zeros((H3, OUT_PAD), bf16).at[:, :OUT].set(params["w4"].astype(bf16))
    b4p = jnp.zeros((1, OUT_PAD), jnp.float32).at[:, :OUT].set(params["b4"])
    b1 = params["b1"].astype(jnp.float32)
    b2 = params["b2"].astype(jnp.float32)
    b3 = params["b3"].astype(jnp.float32)

    def full(shape):
        # Weight / bias blocks: same full block at every grid step.
        return pl.BlockSpec(shape, lambda i: (0, 0))

    out_padded = pl.pallas_call(
        _mlp_kernel,
        out_shape=jax.ShapeDtypeStruct((B, OUT_PAD), jnp.float32),
        grid_spec=pltpu.PrefetchScalarGridSpec(
            num_scalar_prefetch=0,
            grid=grid,
            in_specs=[
                pl.BlockSpec((block_b, D), lambda i: (i, 0)),
                full((D, H1)), full((1, H1)),
                full((H1, H2)), full((1, H2)),
                full((H2, H3)), full((1, H3)),
                full((H3, OUT_PAD)), full((1, OUT_PAD)),
            ],
            out_specs=pl.BlockSpec((block_b, OUT_PAD), lambda i: (i, 0)),
        ),
        compiler_params=pltpu.CompilerParams(
            dimension_semantics=("parallel",),
        ),
    )(x_bf, w1, b1, w2, b2, w3, b3, w4p, b4p)

    return out_padded[:, :OUT]


def init_params(key):
    """Deterministic synthetic parameters (shapes match the nn.Linear layers)."""
    ks = jax.random.split(key, 8)

    def lin(kw, kb, fan_in, fan_out):
        scale = 1.0 / jnp.sqrt(jnp.float32(fan_in))
        w = jax.random.uniform(kw, (fan_in, fan_out), jnp.float32, -scale, scale)
        b = jax.random.uniform(kb, (1, fan_out), jnp.float32, -scale, scale)
        return w, b

    w1, b1 = lin(ks[0], ks[1], D, H1)
    w2, b2 = lin(ks[2], ks[3], H1, H2)
    w3, b3 = lin(ks[4], ks[5], H2, H3)
    w4, b4 = lin(ks[6], ks[7], H3, OUT)
    return dict(w1=w1, b1=b1, w2=w2, b2=b2, w3=w3, b3=b3, w4=w4, b4=b4)


def _reference(x, p):
    h = jax.nn.sigmoid(x @ p["w1"] + p["b1"])
    h = jax.nn.sigmoid(h @ p["w2"] + p["b2"])
    h = jax.nn.sigmoid(h @ p["w3"] + p["b3"])
    return h @ p["w4"] + p["b4"]


if __name__ == "__main__":
    key = jax.random.PRNGKey(0)
    kx, kp = jax.random.split(key)

    B = 8
    x = jax.random.normal(kx, (B, D), jnp.float32)
    params = init_params(kp)

    out = net_forward(x, params)
    out = jax.block_until_ready(out)

    ref = _reference(x, params)
    assert out.shape == (B, OUT)
    # bf16 matmul inputs (f32 accumulation) -> loosened tolerance vs f32 ref.
    assert jnp.allclose(out, ref, atol=3e-2, rtol=3e-2), (
        f"max abs err {jnp.max(jnp.abs(out - ref))}")

    print("KERNEL_OK")
</pallas_src>

<mosaic_0001>
module attributes {stable_mosaic.version = 11 : i64} {
  func.func @_mlp_kernel(%arg0: i32, %arg1: memref<8x32xbf16, #tpu.memory_space<vmem>>, %arg2: memref<32x1024xbf16, #tpu.memory_space<vmem>>, %arg3: memref<1x1024xf32, #tpu.memory_space<vmem>>, %arg4: memref<1024x512xbf16, #tpu.memory_space<vmem>>, %arg5: memref<1x512xf32, #tpu.memory_space<vmem>>, %arg6: memref<512x256xbf16, #tpu.memory_space<vmem>>, %arg7: memref<1x256xf32, #tpu.memory_space<vmem>>, %arg8: memref<256x128xbf16, #tpu.memory_space<vmem>>, %arg9: memref<1x128xf32, #tpu.memory_space<vmem>>, %arg10: memref<8x128xf32, #tpu.memory_space<vmem>>) attributes {dimension_semantics = [#tpu.dimension_semantics<parallel>], iteration_bounds = array<i64: 1>, scalar_prefetch = 0 : i64, scratch_operands = 0 : i64, tpu.core_type = #tpu.core_type<tc>, window_params = [{transform_indices = @transform_0, window_bounds = array<i64: 8, 32>}, {pipeline_mode = #tpu.pipeline_mode<synchronous>, transform_indices = @transform_1, window_bounds = array<i64: 32, 1024>}, {pipeline_mode = #tpu.pipeline_mode<synchronous>, transform_indices = @transform_2, window_bounds = array<i64: 1, 1024>}, {pipeline_mode = #tpu.pipeline_mode<synchronous>, transform_indices = @transform_3, window_bounds = array<i64: 1024, 512>}, {pipeline_mode = #tpu.pipeline_mode<synchronous>, transform_indices = @transform_4, window_bounds = array<i64: 1, 512>}, {pipeline_mode = #tpu.pipeline_mode<synchronous>, transform_indices = @transform_5, window_bounds = array<i64: 512, 256>}, {pipeline_mode = #tpu.pipeline_mode<synchronous>, transform_indices = @transform_6, window_bounds = array<i64: 1, 256>}, {pipeline_mode = #tpu.pipeline_mode<synchronous>, transform_indices = @transform_7, window_bounds = array<i64: 256, 128>}, {pipeline_mode = #tpu.pipeline_mode<synchronous>, transform_indices = @transform_8, window_bounds = array<i64: 1, 128>}, {transform_indices = @transform_9, window_bounds = array<i64: 8, 128>}]} {
    %c0 = arith.constant 0 : index
    %c0_0 = arith.constant 0 : index
    %0 = vector.load %arg1[%c0, %c0_0] : memref<8x32xbf16, #tpu.memory_space<vmem>>, vector<8x32xbf16>
    %c0_1 = arith.constant 0 : index
    %c0_2 = arith.constant 0 : index
    %1 = vector.load %arg2[%c0_1, %c0_2] : memref<32x1024xbf16, #tpu.memory_space<vmem>>, vector<32x1024xbf16>
    %cst = arith.constant dense<0.000000e+00> : vector<8x1024xf32>
    %2 = tpu.matmul %0, %1, %cst {dimension_numbers = #tpu.dot_dimension_numbers<[1], [0], [0], [1], [0, 0, 1, 1], [], []>} : vector<8x32xbf16>, vector<32x1024xbf16>, vector<8x1024xf32> -> vector<8x1024xf32>
    %c0_3 = arith.constant 0 : index
    %c0_4 = arith.constant 0 : index
    %3 = vector.load %arg3[%c0_3, %c0_4] : memref<1x1024xf32, #tpu.memory_space<vmem>>, vector<1x1024xf32>
    %4 = vector.broadcast %3 : vector<1x1024xf32> to vector<8x1024xf32>
    %5 = arith.addf %2, %4 : vector<8x1024xf32>
    %cst_5 = arith.constant 0.000000e+00 : f32
    %6 = vector.broadcast %cst_5 : f32 to vector<8x1024xf32>
    %7 = arith.subf %6, %5 : vector<8x1024xf32>
    %8 = math.exp %7 : vector<8x1024xf32>
    %cst_6 = arith.constant 1.000000e+00 : f32
    %9 = vector.broadcast %cst_6 : f32 to vector<8x1024xf32>
    %10 = arith.addf %9, %8 : vector<8x1024xf32>
    %11 = tpu.reciprocal %10 {approx = true} : vector<8x1024xf32> -> vector<8x1024xf32>
    %12 = arith.truncf %11 : vector<8x1024xf32> to vector<8x1024xbf16>
    %c0_7 = arith.constant 0 : index
    %c0_8 = arith.constant 0 : index
    %13 = vector.load %arg4[%c0_7, %c0_8] : memref<1024x512xbf16, #tpu.memory_space<vmem>>, vector<1024x512xbf16>
    %cst_9 = arith.constant dense<0.000000e+00> : vector<8x512xf32>
    %14 = tpu.matmul %12, %13, %cst_9 {dimension_numbers = #tpu.dot_dimension_numbers<[1], [0], [0], [1], [0, 0, 1, 1], [], []>} : vector<8x1024xbf16>, vector<1024x512xbf16>, vector<8x512xf32> -> vector<8x512xf32>
    %c0_10 = arith.constant 0 : index
    %c0_11 = arith.constant 0 : index
    %15 = vector.load %arg5[%c0_10, %c0_11] : memref<1x512xf32, #tpu.memory_space<vmem>>, vector<1x512xf32>
    %16 = vector.broadcast %15 : vector<1x512xf32> to vector<8x512xf32>
    %17 = arith.addf %14, %16 : vector<8x512xf32>
    %cst_12 = arith.constant 0.000000e+00 : f32
    %18 = vector.broadcast %cst_12 : f32 to vector<8x512xf32>
    %19 = arith.subf %18, %17 : vector<8x512xf32>
    %20 = math.exp %19 : vector<8x512xf32>
    %cst_13 = arith.constant 1.000000e+00 : f32
    %21 = vector.broadcast %cst_13 : f32 to vector<8x512xf32>
    %22 = arith.addf %21, %20 : vector<8x512xf32>
    %23 = tpu.reciprocal %22 {approx = true} : vector<8x512xf32> -> vector<8x512xf32>
    %24 = arith.truncf %23 : vector<8x512xf32> to vector<8x512xbf16>
    %c0_14 = arith.constant 0 : index
    %c0_15 = arith.constant 0 : index
    %25 = vector.load %arg6[%c0_14, %c0_15] : memref<512x256xbf16, #tpu.memory_space<vmem>>, vector<512x256xbf16>
    %cst_16 = arith.constant dense<0.000000e+00> : vector<8x256xf32>
    %26 = tpu.matmul %24, %25, %cst_16 {dimension_numbers = #tpu.dot_dimension_numbers<[1], [0], [0], [1], [0, 0, 1, 1], [], []>} : vector<8x512xbf16>, vector<512x256xbf16>, vector<8x256xf32> -> vector<8x256xf32>
    %c0_17 = arith.constant 0 : index
    %c0_18 = arith.constant 0 : index
    %27 = vector.load %arg7[%c0_17, %c0_18] : memref<1x256xf32, #tpu.memory_space<vmem>>, vector<1x256xf32>
    %28 = vector.broadcast %27 : vector<1x256xf32> to vector<8x256xf32>
    %29 = arith.addf %26, %28 : vector<8x256xf32>
    %cst_19 = arith.constant 0.000000e+00 : f32
    %30 = vector.broadcast %cst_19 : f32 to vector<8x256xf32>
    %31 = arith.subf %30, %29 : vector<8x256xf32>
    %32 = math.exp %31 : vector<8x256xf32>
    %cst_20 = arith.constant 1.000000e+00 : f32
    %33 = vector.broadcast %cst_20 : f32 to vector<8x256xf32>
    %34 = arith.addf %33, %32 : vector<8x256xf32>
    %35 = tpu.reciprocal %34 {approx = true} : vector<8x256xf32> -> vector<8x256xf32>
    %36 = arith.truncf %35 : vector<8x256xf32> to vector<8x256xbf16>
    %c0_21 = arith.constant 0 : index
    %c0_22 = arith.constant 0 : index
    %37 = vector.load %arg8[%c0_21, %c0_22] : memref<256x128xbf16, #tpu.memory_space<vmem>>, vector<256x128xbf16>
    %cst_23 = arith.constant dense<0.000000e+00> : vector<8x128xf32>
    %38 = tpu.matmul %36, %37, %cst_23 {dimension_numbers = #tpu.dot_dimension_numbers<[1], [0], [0], [1], [0, 0, 1, 1], [], []>} : vector<8x256xbf16>, vector<256x128xbf16>, vector<8x128xf32> -> vector<8x128xf32>
    %c0_24 = arith.constant 0 : index
    %c0_25 = arith.constant 0 : index
    %39 = vector.load %arg9[%c0_24, %c0_25] : memref<1x128xf32, #tpu.memory_space<vmem>>, vector<1x128xf32>
    %40 = vector.broadcast %39 : vector<1x128xf32> to vector<8x128xf32>
    %41 = arith.addf %38, %40 : vector<8x128xf32>
    %c0_26 = arith.constant 0 : index
    %c0_27 = arith.constant 0 : index
    %42 = vector.load %arg10[%c0_26, %c0_27] : memref<8x128xf32, #tpu.memory_space<vmem>>, vector<8x128xf32>
    tpu.vector_store %arg10[%c0_26, %c0_27], %41 {strides = array<i32>} : memref<8x128xf32, #tpu.memory_space<vmem>>, vector<8x128xf32>,
    return
  }
  func.func @transform_0(%arg0: i32) -> (i32, i32) {
    %c0_i32 = arith.constant 0 : i32
    %c0_i32_0 = arith.constant 0 : i32
    return %arg0, %c0_i32 : i32, i32
  }
  func.func @transform_1(%arg0: i32) -> (i32, i32) {
    %c0_i32 = arith.constant 0 : i32
    %c0_i32_0 = arith.constant 0 : i32
    %c0_i32_1 = arith.constant 0 : i32
    return %c0_i32, %c0_i32_0 : i32, i32
  }
  func.func @transform_2(%arg0: i32) -> (i32, i32) {
    %c0_i32 = arith.constant 0 : i32
    %c0_i32_0 = arith.constant 0 : i32
    %c0_i32_1 = arith.constant 0 : i32
    return %c0_i32, %c0_i32_0 : i32, i32
  }
  func.func @transform_3(%arg0: i32) -> (i32, i32) {
    %c0_i32 = arith.constant 0 : i32
    %c0_i32_0 = arith.constant 0 : i32
    %c0_i32_1 = arith.constant 0 : i32
    return %c0_i32, %c0_i32_0 : i32, i32
  }
  func.func @transform_4(%arg0: i32) -> (i32, i32) {
    %c0_i32 = arith.constant 0 : i32
    %c0_i32_0 = arith.constant 0 : i32
    %c0_i32_1 = arith.constant 0 : i32
    return %c0_i32, %c0_i32_0 : i32, i32
  }
  func.func @transform_5(%arg0: i32) -> (i32, i32) {
    %c0_i32 = arith.constant 0 : i32
    %c0_i32_0 = arith.constant 0 : i32
    %c0_i32_1 = arith.constant 0 : i32
    return %c0_i32, %c0_i32_0 : i32, i32
  }
  func.func @transform_6(%arg0: i32) -> (i32, i32) {
    %c0_i32 = arith.constant 0 : i32
    %c0_i32_0 = arith.constant 0 : i32
    %c0_i32_1 = arith.constant 0 : i32
    return %c0_i32, %c0_i32_0 : i32, i32
  }
  func.func @transform_7(%arg0: i32) -> (i32, i32) {
    %c0_i32 = arith.constant 0 : i32
    %c0_i32_0 = arith.constant 0 : i32
    %c0_i32_1 = arith.constant 0 : i32
    return %c0_i32, %c0_i32_0 : i32, i32
  }
  func.func @transform_8(%arg0: i32) -> (i32, i32) {
    %c0_i32 = arith.constant 0 : i32
    %c0_i32_0 = arith.constant 0 : i32
    %c0_i32_1 = arith.constant 0 : i32
    return %c0_i32, %c0_i32_0 : i32, i32
  }
  func.func @transform_9(%arg0: i32) -> (i32, i32) {
    %c0_i32 = arith.constant 0 : i32
    %c0_i32_0 = arith.constant 0 : i32
    return %arg0, %c0_i32 : i32, i32
  }
}

</mosaic_0001>

<llo_original>
// kernel: tpu_custom_call.1
$region0: #{tpu_custom_call.1}
  #allocation0 [shape = 'u32[]', space=smem, size = 0x4, offset = 0x4, fixed_abs, tag = 'smem constant byte address 0x4 - core index']
  #allocation1 [shape = 'u32[144,128]{1,0:T(1,128)}', space=vmem, size = 0x12000, scoped, tag = 'internal scratch']
  %s0 = inlined_call_operand.hbm [shape: bf16[8,32], index: 0, kind: input, shape index: {}]
  %s1 = inlined_call_operand.hbm [shape: bf16[32,1024], index: 1, kind: input, shape index: {}]
  %s2 = inlined_call_operand.hbm [shape: f32[1,1024], index: 2, kind: input, shape index: {}]
  %s3 = inlined_call_operand.hbm [shape: bf16[1024,512], index: 3, kind: input, shape index: {}]
  %s4 = inlined_call_operand.vmem [shape: f32[1,512], index: 4, kind: input, shape index: {}]
  %s5 = inlined_call_operand.hbm [shape: bf16[512,256], index: 5, kind: input, shape index: {}]
  %s6 = inlined_call_operand.vmem [shape: f32[1,256], index: 6, kind: input, shape index: {}]
  %s7 = inlined_call_operand.hbm [shape: bf16[256,128], index: 7, kind: input, shape index: {}]
  %s8 = inlined_call_operand.vmem [shape: f32[1,128], index: 8, kind: input, shape index: {}]
  %s9 = inlined_call_operand.hbm [shape: f32[8,128], index: 9, kind: output, shape index: {}]
  %s10 = sld [smem:[#allocation0]]
  $region70: #{tpu_custom_call.1} parent=0
    _
  %s12 = ssub.s32 1, %s10
  %s13 = scalar_select 0, %s12, %s10
  $region1: #{tpu_custom_call.1} parent=0
    #allocation2 [shape = 'u8[2048]{0}', space=vmem, size = 0x800, scoped, tag = 'input window, operand 0, single buffered']
    #allocation3 [shape = 's32[1]{0}', space=sflag, size = 0x4, scoped, tag = 'scoped memory for tpu_custom_call.1']
    #allocation4 [shape = 's32[1]{0}', space=sflag, size = 0x4, scoped, tag = 'scoped memory for tpu_custom_call.1']
    #allocation5 [shape = 'u8[65536]{0}', space=vmem, size = 0x10000, scoped, tag = 'input window, operand 1, single buffered']
    #allocation6 [shape = 's32[1]{0}', space=sflag, size = 0x4, scoped, tag = 'scoped memory for tpu_custom_call.1']
    #allocation7 [shape = 'u8[4096]{0}', space=vmem, size = 0x1000, scoped, tag = 'input window, operand 2, single buffered']
    #allocation8 [shape = 'u8[1048576]{0}', space=vmem, size = 0x100000, scoped, tag = 'input window, operand 3, single buffered']
    #allocation9 [shape = 's32[1]{0}', space=sflag, size = 0x4, scoped, tag = 'scoped memory for tpu_custom_call.1']
    #allocation10 [shape = 'u8[262144]{0}', space=vmem, size = 0x40000, scoped, tag = 'input window, operand 5, single buffered']
    #allocation11 [shape = 'u8[65536]{0}', space=vmem, size = 0x10000, scoped, tag = 'input window, operand 7, single buffered']
    #allocation12 [shape = 's32[1]{0}', space=sflag, size = 0x4, scoped, tag = 'scoped memory for tpu_custom_call.1']
    #allocation13 [shape = 'u8[4096]{0}', space=vmem, size = 0x1000, scoped, tag = 'output window, operand 0, single buffered']
    %14 = vsyncpa [#allocation3], 0
    %15 = vsyncpa [#allocation6], 0
    %16 = vsyncpa [#allocation9], 0
    %17 = vsyncpa [#allocation12], 0
    %18 = vsyncpa [#allocation4], 0
    // Predicated region
    $region2: #{tpu_custom_call.1} parent=1 // pred_check
      _
    $region3: #{tpu_custom_call.1} parent=1 // pred_check_branch
      %20 = sbr.rel (0) target = $region5
    $region4: #{tpu_custom_call.1} parent=1 // pred_region
      %s22 = ssub.s32 64, 64
      %23 = vsyncadd [#allocation3], %s22
      %s25 = sshll.u32 [#allocation2], 4
      %s26 = int_to_ptr.vmem [resolvable:$true] %s25
      %28 = dma.hbm_to_vmem [thread:$0]  %s0, 64, %s26, [#allocation3]
    $region5: #{tpu_custom_call.1} parent=1 // pred_fallthru
      _
    // Predicated region
    $region6: #{tpu_custom_call.1} parent=1 // pred_check
      _
    $region7: #{tpu_custom_call.1} parent=1 // pred_check_branch
      %30 = sbr.rel (0) target = $region9
    $region8: #{tpu_custom_call.1} parent=1 // pred_region
      %s32 = ssub.s32 2048, 2048
      %33 = vsyncadd [#allocation6], %s32
      %s34 = sshll.u32 [#allocation5], 4
      %s35 = int_to_ptr.vmem [resolvable:$true] %s34
      %40 = dma.hbm_to_vmem [thread:$0]  %s1, 2048, %s35, [#allocation6], 512, 512, 32
    $region9: #{tpu_custom_call.1} parent=1 // pred_fallthru
      _
    // Predicated region
    $region10: #{tpu_custom_call.1} parent=1 // pred_check
      _
    $region11: #{tpu_custom_call.1} parent=1 // pred_check_branch
      %42 = sbr.rel (0) target = $region13
    $region12: #{tpu_custom_call.1} parent=1 // pred_region
      %s44 = ssub.s32 128, 128
      %45 = vsyncadd [#allocation6], %s44
      %s47 = sshll.u32 [#allocation7], 4
      %s48 = int_to_ptr.vmem [resolvable:$true] %s47
      %50 = dma.hbm_to_vmem [thread:$0]  %s2, 128, %s48, [#allocation6]
    $region13: #{tpu_custom_call.1} parent=1 // pred_fallthru
      _
    // Predicated region
    $region14: #{tpu_custom_call.1} parent=1 // pred_check
      _
    $region15: #{tpu_custom_call.1} parent=1 // pred_check_branch
      %52 = sbr.rel (0) target = $region17
    $region16: #{tpu_custom_call.1} parent=1 // pred_region
      %s54 = ssub.s32 32768, 32768
      %55 = vsyncadd [#allocation9], %s54
      %s56 = sshll.u32 [#allocation8], 4
      %s57 = int_to_ptr.vmem [resolvable:$true] %s56
      %62 = dma.hbm_to_vmem [thread:$0]  %s3, 32768, %s57, [#allocation9], 256, 256, 16
    $region17: #{tpu_custom_call.1} parent=1 // pred_fallthru
      _
    // Predicated region
    $region18: #{tpu_custom_call.1} parent=1 // pred_check
      _
    $region19: #{tpu_custom_call.1} parent=1 // pred_check_branch
      %64 = sbr.rel (0) target = $region21
    $region20: #{tpu_custom_call.1} parent=1 // pred_region
      _
    $region21: #{tpu_custom_call.1} parent=1 // pred_fallthru
      _
    // Predicated region
    $region22: #{tpu_custom_call.1} parent=1 // pred_check
      _
    $region23: #{tpu_custom_call.1} parent=1 // pred_check_branch
      %66 = sbr.rel (0) target = $region25
    $region24: #{tpu_custom_call.1} parent=1 // pred_region
      %s68 = ssub.s32 8192, 8192
      %69 = vsyncadd [#allocation9], %s68
      %s70 = sshll.u32 [#allocation10], 4
      %s71 = int_to_ptr.vmem [resolvable:$true] %s70
      %76 = dma.hbm_to_vmem [thread:$0]  %s5, 8192, %s71, [#allocation9], 128, 128, 8
    $region25: #{tpu_custom_call.1} parent=1 // pred_fallthru
      _
    // Predicated region
    $region26: #{tpu_custom_call.1} parent=1 // pred_check
      _
    $region27: #{tpu_custom_call.1} parent=1 // pred_check_branch
      %78 = sbr.rel (0) target = $region29
    $region28: #{tpu_custom_call.1} parent=1 // pred_region
      _
    $region29: #{tpu_custom_call.1} parent=1 // pred_fallthru
      _
    // Predicated region
    $region30: #{tpu_custom_call.1} parent=1 // pred_check
      _
    $region31: #{tpu_custom_call.1} parent=1 // pred_check_branch
      %80 = sbr.rel (0) target = $region33
    $region32: #{tpu_custom_call.1} parent=1 // pred_region
      %s82 = ssub.s32 2048, 2048
      %83 = vsyncadd [#allocation12], %s82
      %s84 = sshll.u32 [#allocation11], 4
      %s85 = int_to_ptr.vmem [resolvable:$true] %s84
      %90 = dma.hbm_to_vmem [thread:$0]  %s7, 2048, %s85, [#allocation12], 64, 64, 4
    $region33: #{tpu_custom_call.1} parent=1 // pred_fallthru
      _
    // Predicated region
    $region34: #{tpu_custom_call.1} parent=1 // pred_check
      _
    $region35: #{tpu_custom_call.1} parent=1 // pred_check_branch
      %92 = sbr.rel (0) target = $region37
    $region36: #{tpu_custom_call.1} parent=1 // pred_region
      _
    $region37: #{tpu_custom_call.1} parent=1 // pred_fallthru
      _
    // Predicated region
    $region38: #{tpu_custom_call.1} parent=1 // pred_check
      _
    $region39: #{tpu_custom_call.1} parent=1 // pred_check_branch
      %94 = sbr.rel (0) target = $region41
    $region40: #{tpu_custom_call.1} parent=1 // pred_region
      %95 = dma.done [#allocation3], 64
    $region41: #{tpu_custom_call.1} parent=1 // pred_fallthru
      _
    // Predicated region
    $region42: #{tpu_custom_call.1} parent=1 // pred_check
      _
    $region43: #{tpu_custom_call.1} parent=1 // pred_check_branch
      %97 = sbr.rel (0) target = $region45
    $region44: #{tpu_custom_call.1} parent=1 // pred_region
      %98 = dma.done [#allocation6], 2048
    $region45: #{tpu_custom_call.1} parent=1 // pred_fallthru
      _
    // Predicated region
    $region46: #{tpu_custom_call.1} parent=1 // pred_check
      _
    $region47: #{tpu_custom_call.1} parent=1 // pred_check_branch
      %100 = sbr.rel (0) target = $region49
    $region48: #{tpu_custom_call.1} parent=1 // pred_region
      %101 = dma.done [#allocation6], 128
    $region49: #{tpu_custom_call.1} parent=1 // pred_fallthru
      _
    // Predicated region
    $region50: #{tpu_custom_call.1} parent=1 // pred_check
      _
    $region51: #{tpu_custom_call.1} parent=1 // pred_check_branch
      %103 = sbr.rel (0) target = $region53
    $region52: #{tpu_custom_call.1} parent=1 // pred_region
      %104 = dma.done [#allocation9], 32768
    $region53: #{tpu_custom_call.1} parent=1 // pred_fallthru
      _
    // Predicated region
    $region54: #{tpu_custom_call.1} parent=1 // pred_check
      _
    $region55: #{tpu_custom_call.1} parent=1 // pred_check_branch
      %106 = sbr.rel (0) target = $region57
    $region56: #{tpu_custom_call.1} parent=1 // pred_region
      %107 = dma.done [#allocation9], 8192
    $region57: #{tpu_custom_call.1} parent=1 // pred_fallthru
      _
    // Predicated region
    $region58: #{tpu_custom_call.1} parent=1 // pred_check
      _
    $region59: #{tpu_custom_call.1} parent=1 // pred_check_branch
      %109 = sbr.rel (0) target = $region61
    $region60: #{tpu_custom_call.1} parent=1 // pred_region
      %110 = dma.done [#allocation12], 2048
    $region61: #{tpu_custom_call.1} parent=1 // pred_fallthru
      _
    %v112 = vld [vmem:[#allocation2] sm:$0xf]
    %v113 = vld [vmem:[#allocation5] sm:$0xff]
    %v114 = vld [vmem:[#allocation5 + $0x8] sm:$0xff]
    %v115 = vld [vmem:[#allocation5 + $0x10] sm:$0xff]
    %v116 = vld [vmem:[#allocation5 + $0x18] sm:$0xff]
    %v117 = vld [vmem:[#allocation5 + $0x20] sm:$0xff]
    %v118 = vld [vmem:[#allocation5 + $0x28] sm:$0xff]
    %v119 = vld [vmem:[#allocation5 + $0x30] sm:$0xff]
    %v120 = vld [vmem:[#allocation5 + $0x38] sm:$0xff]
    %v121 = vld [vmem:[#allocation5 + $0x40] sm:$0xff]
    %v122 = vld [vmem:[#allocation5 + $0x48] sm:$0xff]
    %v123 = vld [vmem:[#allocation5 + $0x50] sm:$0xff]
    %v124 = vld [vmem:[#allocation5 + $0x58] sm:$0xff]
    %v125 = vld [vmem:[#allocation5 + $0x60] sm:$0xff]
    %v126 = vld [vmem:[#allocation5 + $0x68] sm:$0xff]
    %v127 = vld [vmem:[#allocation5 + $0x70] sm:$0xff]
    %v128 = vld [vmem:[#allocation5 + $0x78] sm:$0xff]
    %v129 = vld [vmem:[#allocation7] sm:$0xff]
    %v131 = vlaneseq
    %v132 = vshrl.u32 %v131, 7
    %v133 = vsub.s32 0, %v132
    %v134 = vrot.slane %v129, %v133
    %v135 = vlaneseq
    %v136 = vshrl.u32 %v135, 7
    %v137 = vsub.s32 1, %v136
    %v138 = vrot.slane %v129, %v137
    %v139 = vlaneseq
    %v140 = vshrl.u32 %v139, 7
    %v141 = vsub.s32 2, %v140
    %v142 = vrot.slane %v129, %v141
    %v143 = vlaneseq
    %v144 = vshrl.u32 %v143, 7
    %v145 = vsub.s32 3, %v144
    %v146 = vrot.slane %v129, %v145
    %v147 = vlaneseq
    %v148 = vshrl.u32 %v147, 7
    %v149 = vsub.s32 4, %v148
    %v150 = vrot.slane %v129, %v149
    %v151 = vlaneseq
    %v152 = vshrl.u32 %v151, 7
    %v153 = vsub.s32 5, %v152
    %v154 = vrot.slane %v129, %v153
    %v155 = vlaneseq
    %v156 = vshrl.u32 %v155, 7
    %v157 = vsub.s32 6, %v156
    %v158 = vrot.slane %v129, %v157
    %v159 = vlaneseq
    %v160 = vshrl.u32 %v159, 7
    %v161 = vsub.s32 7, %v160
    %v162 = vrot.slane %v129, %v161
    %v187 = vunpack.c.l.b16 %v113
    %v188 = vunpack.c.h.b16 %v113
    %v189 = vunpack.c.l.b16 %v114
    %v190 = vunpack.c.h.b16 %v114
    %v191 = vunpack.c.l.b16 %v115
    %v192 = vunpack.c.h.b16 %v115
    %v193 = vunpack.c.l.b16 %v116
    %v194 = vunpack.c.h.b16 %v116
    %v195 = vunpack.c.l.b16 %v117
    %v196 = vunpack.c.h.b16 %v117
    %v197 = vunpack.c.l.b16 %v118
    %v198 = vunpack.c.h.b16 %v118
    %v199 = vunpack.c.l.b16 %v119
    %v200 = vunpack.c.h.b16 %v119
    %v201 = vunpack.c.l.b16 %v120
    %v202 = vunpack.c.h.b16 %v120
    %v203 = vunpack.c.l.b16 %v121
    %v204 = vunpack.c.h.b16 %v121
    %v205 = vunpack.c.l.b16 %v122
    %v206 = vunpack.c.h.b16 %v122
    %v207 = vunpack.c.l.b16 %v123
    %v208 = vunpack.c.h.b16 %v123
    %v209 = vunpack.c.l.b16 %v124
    %v210 = vunpack.c.h.b16 %v124
    %v211 = vunpack.c.l.b16 %v125
    %v212 = vunpack.c.h.b16 %v125
    %v213 = vunpack.c.l.b16 %v126
    %v214 = vunpack.c.h.b16 %v126
    %v215 = vunpack.c.l.b16 %v127
    %v216 = vunpack.c.h.b16 %v127
    %v217 = vunpack.c.l.b16 %v128
    %v218 = vunpack.c.h.b16 %v128
    %v219 = vpack.c.b16 %v195, %v187
    %v220 = vpack.c.b16 %v196, %v188
    %v221 = vpack.c.b16 %v197, %v189
    %v222 = vpack.c.b16 %v198, %v190
    %v223 = vpack.c.b16 %v199, %v191
    %v224 = vpack.c.b16 %v200, %v192
    %v225 = vpack.c.b16 %v201, %v193
    %v226 = vpack.c.b16 %v202, %v194
    %v227 = vpack.c.b16 %v211, %v203
    %v228 = vpack.c.b16 %v212, %v204
    %v229 = vpack.c.b16 %v213, %v205
    %v230 = vpack.c.b16 %v214, %v206
    %v231 = vpack.c.b16 %v215, %v207
    %v232 = vpack.c.b16 %v216, %v208
    %v233 = vpack.c.b16 %v217, %v209
    %v234 = vpack.c.b16 %v218, %v210
    %vm251 = vcmask 261120
    %v253 = vsel %vm251, %v112, 0
    %255 = vmatprep.subr.bf16.mxu0 %v220
    %256 = vmatpush1.bf16.msra.mxu0 %v219
    %257 = vmatprep.subr.bf16.mxu0 %v228
    %258 = vmatpush1.bf16.msra.mxu0 %v227
    %259 = vmatprep.subr.bf16.mxu0 0
    %260 = vmatpush1.bf16.msra.mxu0 0
    %261 = vmatprep.subr.bf16.mxu0 0
    %262 = vmatpush1.bf16.msra.mxu0 0
    %263 = vmatprep.subr.bf16.mxu0 0
    %264 = vmatpush1.bf16.msra.mxu0 0
    %265 = vmatprep.subr.bf16.mxu0 0
    %266 = vmatpush1.bf16.msra.mxu0 0
    %267 = vmatprep.subr.bf16.mxu0 0
    %268 = vmatpush1.bf16.msra.mxu0 0
    %269 = vmatprep.subr.bf16.mxu0 0
    %270 = vmatpush1.bf16.msra.mxu0 0
    %271 = vmatprep.subr.bf16.mxu0 0
    %272 = vmatpush1.bf16.msra.mxu0 0
    %273 = vmatprep.subr.bf16.mxu0 0
    %274 = vmatpush1.bf16.msra.mxu0 0
    %275 = vmatprep.subr.bf16.mxu0 0
    %276 = vmatpush1.bf16.msra.mxu0 0
    %277 = vmatprep.subr.bf16.mxu0 0
    %278 = vmatpush1.bf16.msra.mxu0 0
    %279 = vmatprep.subr.bf16.mxu0 0
    %280 = vmatpush1.bf16.msra.mxu0 0
    %281 = vmatprep.subr.bf16.mxu0 0
    %282 = vmatpush1.bf16.msra.mxu0 0
    %283 = vmatprep.subr.bf16.mxu0 0
    %284 = vmatpush1.bf16.msra.mxu0 0
    %285 = vmatprep.subr.bf16.mxu0 0
    %286 = vmatpush1.bf16.msra.mxu0 0
    %287 = vmatprep.mubr.bf16.mxu0 0
    %288 = vmatmul.mubr.bf16.gmra.mrb[0].mxu0 %v253
    %v289 = vpop.f32.mrb[0].mxu0
    %v290 = vadd.f32 %v134, %v289
    %v291 = vpop.f32.mrb[0].mxu0
    %v292 = vadd.f32 %v138, %v291
    %v293 = vpop.f32.mrb[0].mxu0
    %v294 = vpop.f32.mrb[0].mxu0
    %295 = vdwg.mxu0
    %296 = vmatprep.subr.bf16.mxu0 %v222
    %297 = vmatpush1.bf16.msra.mxu0 %v221
    %298 = vmatprep.subr.bf16.mxu0 %v230
    %299 = vmatpush1.bf16.msra.mxu0 %v229
    %300 = vmatprep.subr.bf16.mxu0 0
    %301 = vmatpush1.bf16.msra.mxu0 0
    %302 = vmatprep.subr.bf16.mxu0 0
    %303 = vmatpush1.bf16.msra.mxu0 0
    %304 = vmatprep.subr.bf16.mxu0 0
    %305 = vmatpush1.bf16.msra.mxu0 0
    %306 = vmatprep.subr.bf16.mxu0 0
    %307 = vmatpush1.bf16.msra.mxu0 0
    %308 = vmatprep.subr.bf16.mxu0 0
    %309 = vmatpush1.bf16.msra.mxu0 0
    %310 = vmatprep.subr.bf16.mxu0 0
    %311 = vmatpush1.bf16.msra.mxu0 0
    %312 = vmatprep.subr.bf16.mxu0 0
    %313 = vmatpush1.bf16.msra.mxu0 0
    %314 = vmatprep.subr.bf16.mxu0 0
    %315 = vmatpush1.bf16.msra.mxu0 0
    %316 = vmatprep.subr.bf16.mxu0 0
    %317 = vmatpush1.bf16.msra.mxu0 0
    %318 = vmatprep.subr.bf16.mxu0 0
    %319 = vmatpush1.bf16.msra.mxu0 0
    %320 = vmatprep.subr.bf16.mxu0 0
    %321 = vmatpush1.bf16.msra.mxu0 0
    %322 = vmatprep.subr.bf16.mxu0 0
    %323 = vmatpush1.bf16.msra.mxu0 0
    %324 = vmatprep.subr.bf16.mxu0 0
    %325 = vmatpush1.bf16.msra.mxu0 0
    %326 = vmatprep.subr.bf16.mxu0 0
    %327 = vmatpush1.bf16.msra.mxu0 0
    %328 = vmatprep.mubr.bf16.mxu0 0
    %329 = vmatmul.mubr.bf16.gmra.mrb[0].mxu0 %v253
    %v330 = vpop.f32.mrb[0].mxu0
    %v331 = vadd.f32 %v142, %v330
    %v332 = vpop.f32.mrb[0].mxu0
    %v333 = vadd.f32 %v146, %v332
    %v334 = vpop.f32.mrb[0].mxu0
    %v335 = vpop.f32.mrb[0].mxu0
    %336 = vdwg.mxu0
    %337 = vmatprep.subr.bf16.mxu0 %v224
    %338 = vmatpush1.bf16.msra.mxu0 %v223
    %339 = vmatprep.subr.bf16.mxu0 %v232
    %340 = vmatpush1.bf16.msra.mxu0 %v231
    %341 = vmatprep.subr.bf16.mxu0 0
    %342 = vmatpush1.bf16.msra.mxu0 0
    %343 = vmatprep.subr.bf16.mxu0 0
    %344 = vmatpush1.bf16.msra.mxu0 0
    %345 = vmatprep.subr.bf16.mxu0 0
    %346 = vmatpush1.bf16.msra.mxu0 0
    %347 = vmatprep.subr.bf16.mxu0 0
    %348 = vmatpush1.bf16.msra.mxu0 0
    %349 = vmatprep.subr.bf16.mxu0 0
    %350 = vmatpush1.bf16.msra.mxu0 0
    %351 = vmatprep.subr.bf16.mxu0 0
    %352 = vmatpush1.bf16.msra.mxu0 0
    %353 = vmatprep.subr.bf16.mxu0 0
    %354 = vmatpush1.bf16.msra.mxu0 0
    %355 = vmatprep.subr.bf16.mxu0 0
    %356 = vmatpush1.bf16.msra.mxu0 0
    %357 = vmatprep.subr.bf16.mxu0 0
    %358 = vmatpush1.bf16.msra.mxu0 0
    %359 = vmatprep.subr.bf16.mxu0 0
    %360 = vmatpush1.bf16.msra.mxu0 0
    %361 = vmatprep.subr.bf16.mxu0 0
    %362 = vmatpush1.bf16.msra.mxu0 0
    %363 = vmatprep.subr.bf16.mxu0 0
    %364 = vmatpush1.bf16.msra.mxu0 0
    %365 = vmatprep.subr.bf16.mxu0 0
    %366 = vmatpush1.bf16.msra.mxu0 0
    %367 = vmatprep.subr.bf16.mxu0 0
    %368 = vmatpush1.bf16.msra.mxu0 0
    %369 = vmatprep.mubr.bf16.mxu0 0
    %370 = vmatmul.mubr.bf16.gmra.mrb[0].mxu0 %v253
    %v371 = vpop.f32.mrb[0].mxu0
    %v372 = vadd.f32 %v150, %v371
    %v373 = vpop.f32.mrb[0].mxu0
    %v374 = vadd.f32 %v154, %v373
    %v375 = vpop.f32.mrb[0].mxu0
    %v376 = vpop.f32.mrb[0].mxu0
    %377 = vdwg.mxu0
    %378 = vmatprep.subr.bf16.mxu0 %v226
    %379 = vmatpush1.bf16.msra.mxu0 %v225
    %380 = vmatprep.subr.bf16.mxu0 %v234
    %381 = vmatpush1.bf16.msra.mxu0 %v233
    %382 = vmatprep.subr.bf16.mxu0 0
    %383 = vmatpush1.bf16.msra.mxu0 0
    %384 = vmatprep.subr.bf16.mxu0 0
    %385 = vmatpush1.bf16.msra.mxu0 0
    %386 = vmatprep.subr.bf16.mxu0 0
    %387 = vmatpush1.bf16.msra.mxu0 0
    %388 = vmatprep.subr.bf16.mxu0 0
    %389 = vmatpush1.bf16.msra.mxu0 0
    %390 = vmatprep.subr.bf16.mxu0 0
    %391 = vmatpush1.bf16.msra.mxu0 0
    %392 = vmatprep.subr.bf16.mxu0 0
    %393 = vmatpush1.bf16.msra.mxu0 0
    %394 = vmatprep.subr.bf16.mxu0 0
    %395 = vmatpush1.bf16.msra.mxu0 0
    %396 = vmatprep.subr.bf16.mxu0 0
    %397 = vmatpush1.bf16.msra.mxu0 0
    %398 = vmatprep.subr.bf16.mxu0 0
    %399 = vmatpush1.bf16.msra.mxu0 0
    %400 = vmatprep.subr.bf16.mxu0 0
    %401 = vmatpush1.bf16.msra.mxu0 0
    %402 = vmatprep.subr.bf16.mxu0 0
    %403 = vmatpush1.bf16.msra.mxu0 0
    %404 = vmatprep.subr.bf16.mxu0 0
    %405 = vmatpush1.bf16.msra.mxu0 0
    %406 = vmatprep.subr.bf16.mxu0 0
    %407 = vmatpush1.bf16.msra.mxu0 0
    %408 = vmatprep.subr.bf16.mxu0 0
    %409 = vmatpush1.bf16.msra.mxu0 0
    %410 = vmatprep.mubr.bf16.mxu0 0
    %411 = vmatmul.mubr.bf16.gmra.mrb[0].mxu0 %v253
    %v412 = vpop.f32.mrb[0].mxu0
    %v413 = vadd.f32 %v158, %v412
    %v414 = vpop.f32.mrb[0].mxu0
    %v415 = vadd.f32 %v162, %v414
    %v416 = vpop.f32.mrb[0].mxu0
    %v417 = vpop.f32.mrb[0].mxu0
    %418 = vdwg.mxu0
    %v419 = vsub.f32 0.0, %v290
    %v420 = vsub.f32 0.0, %v292
    %v421 = vsub.f32 0.0, %v331
    %v422 = vsub.f32 0.0, %v333
    %v423 = vsub.f32 0.0, %v372
    %v424 = vsub.f32 0.0, %v374
    %v425 = vsub.f32 0.0, %v413
    %v426 = vsub.f32 0.0, %v415
    %v427 = vmul.f32 %v419, 1.442695
    %v428 = vpow.pop %v427
    %v429 = vmul.f32 %v420, 1.442695
    %v430 = vpow.pop %v429
    %v431 = vmul.f32 %v421, 1.442695
    %v432 = vpow.pop %v431
    %v433 = vmul.f32 %v422, 1.442695
    %v434 = vpow.pop %v433
    %v435 = vmul.f32 %v423, 1.442695
    %v436 = vpow.pop %v435
    %v437 = vmul.f32 %v424, 1.442695
    %v438 = vpow.pop %v437
    %v439 = vmul.f32 %v425, 1.442695
    %v440 = vpow.pop %v439
    %v441 = vmul.f32 %v426, 1.442695
    %v442 = vpow.pop %v441
    %v443 = vadd.f32 %v428, 1.0
    %v444 = vadd.f32 %v430, 1.0
    %v445 = vadd.f32 %v432, 1.0
    %v446 = vadd.f32 %v434, 1.0
    %v447 = vadd.f32 %v436, 1.0
    %v448 = vadd.f32 %v438, 1.0
    %v449 = vadd.f32 %v440, 1.0
    %v450 = vadd.f32 %v442, 1.0
    %v451 = vrcp.pop %v443
    %v452 = vrcp.pop %v444
    %v453 = vrcp.pop %v445
    %v454 = vrcp.pop %v446
    %v455 = vrcp.pop %v447
    %v456 = vrcp.pop %v448
    %v457 = vrcp.pop %v449
    %v458 = vrcp.pop %v450
    %v459 = vpack.c.bf16 %v451, %v451
    %v460 = vpack.c.bf16 %v452, %v452
    %v461 = vpack.c.bf16 %v453, %v453
    %v462 = vpack.c.bf16 %v454, %v454
    %v463 = vpack.c.bf16 %v455, %v455
    %v464 = vpack.c.bf16 %v456, %v456
    %v465 = vpack.c.bf16 %v457, %v457
    %v466 = vpack.c.bf16 %v458, %v458
    %v467 = vld [vmem:[#allocation8] sm:$0xff]
    %v468 = vld [vmem:[#allocation8 + $0x8] sm:$0xff]
    %v469 = vld [vmem:[#allocation8 + $0x10] sm:$0xff]
    %v470 = vld [vmem:[#allocation8 + $0x18] sm:$0xff]
    %v471 = vld [vmem:[#allocation8 + $0x20] sm:$0xff]
    %v472 = vld [vmem:[#allocation8 + $0x28] sm:$0xff]
    %v473 = vld [vmem:[#allocation8 + $0x30] sm:$0xff]
    %v474 = vld [vmem:[#allocation8 + $0x38] sm:$0xff]
    %v475 = vld [vmem:[#allocation8 + $0x40] sm:$0xff]
    %v476 = vld [vmem:[#allocation8 + $0x48] sm:$0xff]
    %v477 = vld [vmem:[#allocation8 + $0x50] sm:$0xff]
    %v478 = vld [vmem:[#allocation8 + $0x58] sm:$0xff]
    %v479 = vld [vmem:[#allocation8 + $0x60] sm:$0xff]
    %v480 = vld [vmem:[#allocation8 + $0x68] sm:$0xff]
    %v481 = vld [vmem:[#allocation8 + $0x70] sm:$0xff]
    %v482 = vld [vmem:[#allocation8 + $0x78] sm:$0xff]
    %v483 = vld [vmem:[#allocation8 + $0x80] sm:$0xff]
    %v484 = vld [vmem:[#allocation8 + $0x88] sm:$0xff]
    %v485 = vld [vmem:[#allocation8 + $0x90] sm:$0xff]
    %v486 = vld [vmem:[#allocation8 + $0x98] sm:$0xff]
    %v487 = vld [vmem:[#allocation8 + $0xa0] sm:$0xff]
    %v488 = vld [vmem:[#allocation8 + $0xa8] sm:$0xff]
    %v489 = vld [vmem:[#allocation8 + $0xb0] sm:$0xff]
    %v490 = vld [vmem:[#allocation8 + $0xb8] sm:$0xff]
    %v491 = vld [vmem:[#allocation8 + $0xc0] sm:$0xff]
    %v492 = vld [vmem:[#allocation8 + $0xc8] sm:$0xff]
    %v493 = vld [vmem:[#allocation8 + $0xd0] sm:$0xff]
    %v494 = vld [vmem:[#allocation8 + $0xd8] sm:$0xff]
    %v495 = vld [vmem:[#allocation8 + $0xe0] sm:$0xff]
    %v496 = vld [vmem:[#allocation8 + $0xe8] sm:$0xff]
    %v497 = vld [vmem:[#allocation8 + $0xf0] sm:$0xff]
    %v498 = vld [vmem:[#allocation8 + $0xf8] sm:$0xff]
    %v499 = vld [vmem:[#allocation8 + $0x100] sm:$0xff]
    %v500 = vld [vmem:[#allocation8 + $0x108] sm:$0xff]
    %v501 = vld [vmem:[#allocation8 + $0x110] sm:$0xff]
    %v502 = vld [vmem:[#allocation8 + $0x118] sm:$0xff]
    %v503 = vld [vmem:[#allocation8 + $0x120] sm:$0xff]
    %v504 = vld [vmem:[#allocation8 + $0x128] sm:$0xff]
    %v505 = vld [vmem:[#allocation8 + $0x130] sm:$0xff]
    %v506 = vld [vmem:[#allocation8 + $0x138] sm:$0xff]
    %v507 = vld [vmem:[#allocation8 + $0x140] sm:$0xff]
    %v508 = vld [vmem:[#allocation8 + $0x148] sm:$0xff]
    %v509 = vld [vmem:[#allocation8 + $0x150] sm:$0xff]
    %v510 = vld [vmem:[#allocation8 + $0x158] sm:$0xff]
    %v511 = vld [vmem:[#allocation8 + $0x160] sm:$0xff]
    %v512 = vld [vmem:[#allocation8 + $0x168] sm:$0xff]
    %v513 = vld [vmem:[#allocation8 + $0x170] sm:$0xff]
    %v514 = vld [vmem:[#allocation8 + $0x178] sm:$0xff]
    %v515 = vld [vmem:[#allocation8 + $0x180] sm:$0xff]
    %v516 = vld [vmem:[#allocation8 + $0x188] sm:$0xff]
    %v517 = vld [vmem:[#allocation8 + $0x190] sm:$0xff]
    %v518 = vld [vmem:[#allocation8 + $0x198] sm:$0xff]
    %v519 = vld [vmem:[#allocation8 + $0x1a0] sm:$0xff]
    %v520 = vld [vmem:[#allocation8 + $0x1a8] sm:$0xff]
    %v521 = vld [vmem:[#allocation8 + $0x1b0] sm:$0xff]
    %v522 = vld [vmem:[#allocation8 + $0x1b8] sm:$0xff]
    %v523 = vld [vmem:[#allocation8 + $0x1c0] sm:$0xff]
    %v524 = vld [vmem:[#allocation8 + $0x1c8] sm:$0xff]
    %v525 = vld [vmem:[#allocation8 + $0x1d0] sm:$0xff]
    %v526 = vld [vmem:[#allocation8 + $0x1d8] sm:$0xff]
    %v527 = vld [vmem:[#allocation8 + $0x1e0] sm:$0xff]
    %v528 = vld [vmem:[#allocation8 + $0x1e8] sm:$0xff]
    %v529 = vld [vmem:[#allocation8 + $0x1f0] sm:$0xff]
    %v530 = vld [vmem:[#allocation8 + $0x1f8] sm:$0xff]
    %v531 = vld [vmem:[#allocation8 + $0x200] sm:$0xff]
    %v532 = vld [vmem:[#allocation8 + $0x208] sm:$0xff]
    %v533 = vld [vmem:[#allocation8 + $0x210] sm:$0xff]
    %v534 = vld [vmem:[#allocation8 + $0x218] sm:$0xff]
    %v535 = vld [vmem:[#allocation8 + $0x220] sm:$0xff]
    %v536 = vld [vmem:[#allocation8 + $0x228] sm:$0xff]
    %v537 = vld [vmem:[#allocation8 + $0x230] sm:$0xff]
    %v538 = vld [vmem:[#allocation8 + $0x238] sm:$0xff]
    %v539 = vld [vmem:[#allocation8 + $0x240] sm:$0xff]
    %v540 = vld [vmem:[#allocation8 + $0x248] sm:$0xff]
    %v541 = vld [vmem:[#allocation8 + $0x250] sm:$0xff]
    %v542 = vld [vmem:[#allocation8 + $0x258] sm:$0xff]
    %v543 = vld [vmem:[#allocation8 + $0x260] sm:$0xff]
    %v544 = vld [vmem:[#allocation8 + $0x268] sm:$0xff]
    %v545 = vld [vmem:[#allocation8 + $0x270] sm:$0xff]
    %v546 = vld [vmem:[#allocation8 + $0x278] sm:$0xff]
    %v547 = vld [vmem:[#allocation8 + $0x280] sm:$0xff]
    %v548 = vld [vmem:[#allocation8 + $0x288] sm:$0xff]
    %v549 = vld [vmem:[#allocation8 + $0x290] sm:$0xff]
    %v550 = vld [vmem:[#allocation8 + $0x298] sm:$0xff]
    %v551 = vld [vmem:[#allocation8 + $0x2a0] sm:$0xff]
    %v552 = vld [vmem:[#allocation8 + $0x2a8] sm:$0xff]
    %v553 = vld [vmem:[#allocation8 + $0x2b0] sm:$0xff]
    %v554 = vld [vmem:[#allocation8 + $0x2b8] sm:$0xff]
    %v555 = vld [vmem:[#allocation8 + $0x2c0] sm:$0xff]
    %v556 = vld [vmem:[#allocation8 + $0x2c8] sm:$0xff]
    %v557 = vld [vmem:[#allocation8 + $0x2d0] sm:$0xff]
    %v558 = vld [vmem:[#allocation8 + $0x2d8] sm:$0xff]
    %v559 = vld [vmem:[#allocation8 + $0x2e0] sm:$0xff]
    %v560 = vld [vmem:[#allocation8 + $0x2e8] sm:$0xff]
    %v561 = vld [vmem:[#allocation8 + $0x2f0] sm:$0xff]
    %v562 = vld [vmem:[#allocation8 + $0x2f8] sm:$0xff]
    %v563 = vld [vmem:[#allocation8 + $0x300] sm:$0xff]
    %v564 = vld [vmem:[#allocation8 + $0x308] sm:$0xff]
    %v565 = vld [vmem:[#allocation8 + $0x310] sm:$0xff]
    %v566 = vld [vmem:[#allocation8 + $0x318] sm:$0xff]
    %v567 = vld [vmem:[#allocation8 + $0x320] sm:$0xff]
    %v568 = vld [vmem:[#allocation8 + $0x328] sm:$0xff]
    %v569 = vld [vmem:[#allocation8 + $0x330] sm:$0xff]
    %v570 = vld [vmem:[#allocation8 + $0x338] sm:$0xff]
    %v571 = vld [vmem:[#allocation8 + $0x340] sm:$0xff]
    %v572 = vld [vmem:[#allocation8 + $0x348] sm:$0xff]
    %v573 = vld [vmem:[#allocation8 + $0x350] sm:$0xff]
    %v574 = vld [vmem:[#allocation8 + $0x358] sm:$0xff]
    %v575 = vld [vmem:[#allocation8 + $0x360] sm:$0xff]
    %v576 = vld [vmem:[#allocation8 + $0x368] sm:$0xff]
    %v577 = vld [vmem:[#allocation8 + $0x370] sm:$0xff]
    %v578 = vld [vmem:[#allocation8 + $0x378] sm:$0xff]
    %v579 = vld [vmem:[#allocation8 + $0x380] sm:$0xff]
    %v580 = vld [vmem:[#allocation8 + $0x388] sm:$0xff]
    %v581 = vld [vmem:[#allocation8 + $0x390] sm:$0xff]
    %v582 = vld [vmem:[#allocation8 + $0x398] sm:$0xff]
    %v583 = vld [vmem:[#allocation8 + $0x3a0] sm:$0xff]
    %v584 = vld [vmem:[#allocation8 + $0x3a8] sm:$0xff]
    %v585 = vld [vmem:[#allocation8 + $0x3b0] sm:$0xff]
    %v586 = vld [vmem:[#allocation8 + $0x3b8] sm:$0xff]
    %v587 = vld [vmem:[#allocation8 + $0x3c0] sm:$0xff]
    %v588 = vld [vmem:[#allocation8 + $0x3c8] sm:$0xff]
    %v589 = vld [vmem:[#allocation8 + $0x3d0] sm:$0xff]
    %v590 = vld [vmem:[#allocation8 + $0x3d8] sm:$0xff]
    %v591 = vld [vmem:[#allocation8 + $0x3e0] sm:$0xff]
    %v592 = vld [vmem:[#allocation8 + $0x3e8] sm:$0xff]
    %v593 = vld [vmem:[#allocation8 + $0x3f0] sm:$0xff]
    %v594 = vld [vmem:[#allocation8 + $0x3f8] sm:$0xff]
    %v595 = vld [vmem:[#allocation8 + $0x400] sm:$0xff]
    %v596 = vld [vmem:[#allocation8 + $0x408] sm:$0xff]
    %v597 = vld [vmem:[#allocation8 + $0x410] sm:$0xff]
    %v598 = vld [vmem:[#allocation8 + $0x418] sm:$0xff]
    %v599 = vld [vmem:[#allocation8 + $0x420] sm:$0xff]
    %v600 = vld [vmem:[#allocation8 + $0x428] sm:$0xff]
    %v601 = vld [vmem:[#allocation8 + $0x430] sm:$0xff]
    %v602 = vld [vmem:[#allocation8 + $0x438] sm:$0xff]
    %v603 = vld [vmem:[#allocation8 + $0x440] sm:$0xff]
    %v604 = vld [vmem:[#allocation8 + $0x448] sm:$0xff]
    %v605 = vld [vmem:[#allocation8 + $0x450] sm:$0xff]
    %v606 = vld [vmem:[#allocation8 + $0x458] sm:$0xff]
    %v607 = vld [vmem:[#allocation8 + $0x460] sm:$0xff]
    %v608 = vld [vmem:[#allocation8 + $0x468] sm:$0xff]
    %v609 = vld [vmem:[#allocation8 + $0x470] sm:$0xff]
    %v610 = vld [vmem:[#allocation8 + $0x478] sm:$0xff]
    %v611 = vld [vmem:[#allocation8 + $0x480] sm:$0xff]
    %v612 = vld [vmem:[#allocation8 + $0x488] sm:$0xff]
    %v613 = vld [vmem:[#allocation8 + $0x490] sm:$0xff]
    %v614 = vld [vmem:[#allocation8 + $0x498] sm:$0xff]
    %v615 = vld [vmem:[#allocation8 + $0x4a0] sm:$0xff]
    %v616 = vld [vmem:[#allocation8 + $0x4a8] sm:$0xff]
    %v617 = vld [vmem:[#allocation8 + $0x4b0] sm:$0xff]
    %v618 = vld [vmem:[#allocation8 + $0x4b8] sm:$0xff]
    %v619 = vld [vmem:[#allocation8 + $0x4c0] sm:$0xff]
    %v620 = vld [vmem:[#allocation8 + $0x4c8] sm:$0xff]
    %v621 = vld [vmem:[#allocation8 + $0x4d0] sm:$0xff]
    %v622 = vld [vmem:[#allocation8 + $0x4d8] sm:$0xff]
    %v623 = vld [vmem:[#allocation8 + $0x4e0] sm:$0xff]
    %v624 = vld [vmem:[#allocation8 + $0x4e8] sm:$0xff]
    %v625 = vld [vmem:[#allocation8 + $0x4f0] sm:$0xff]
    %v626 = vld [vmem:[#allocation8 + $0x4f8] sm:$0xff]
    %v627 = vld [vmem:[#allocation8 + $0x500] sm:$0xff]
    %v628 = vld [vmem:[#allocation8 + $0x508] sm:$0xff]
    %v629 = vld [vmem:[#allocation8 + $0x510] sm:$0xff]
    %v630 = vld [vmem:[#allocation8 + $0x518] sm:$0xff]
    %v631 = vld [vmem:[#allocation8 + $0x520] sm:$0xff]
    %v632 = vld [vmem:[#allocation8 + $0x528] sm:$0xff]
    %v633 = vld [vmem:[#allocation8 + $0x530] sm:$0xff]
    %v634 = vld [vmem:[#allocation8 + $0x538] sm:$0xff]
    %v635 = vld [vmem:[#allocation8 + $0x540] sm:$0xff]
    %v636 = vld [vmem:[#allocation8 + $0x548] sm:$0xff]
    %v637 = vld [vmem:[#allocation8 + $0x550] sm:$0xff]
    %v638 = vld [vmem:[#allocation8 + $0x558] sm:$0xff]
    %v639 = vld [vmem:[#allocation8 + $0x560] sm:$0xff]
    %v640 = vld [vmem:[#allocation8 + $0x568] sm:$0xff]
    %v641 = vld [vmem:[#allocation8 + $0x570] sm:$0xff]
    %v642 = vld [vmem:[#allocation8 + $0x578] sm:$0xff]
    %v643 = vld [vmem:[#allocation8 + $0x580] sm:$0xff]
    %v644 = vld [vmem:[#allocation8 + $0x588] sm:$0xff]
    %v645 = vld [vmem:[#allocation8 + $0x590] sm:$0xff]
    %v646 = vld [vmem:[#allocation8 + $0x598] sm:$0xff]
    %v647 = vld [vmem:[#allocation8 + $0x5a0] sm:$0xff]
    %v648 = vld [vmem:[#allocation8 + $0x5a8] sm:$0xff]
    %v649 = vld [vmem:[#allocation8 + $0x5b0] sm:$0xff]
    %v650 = vld [vmem:[#allocation8 + $0x5b8] sm:$0xff]
    %v651 = vld [vmem:[#allocation8 + $0x5c0] sm:$0xff]
    %v652 = vld [vmem:[#allocation8 + $0x5c8] sm:$0xff]
    %v653 = vld [vmem:[#allocation8 + $0x5d0] sm:$0xff]
    %v654 = vld [vmem:[#allocation8 + $0x5d8] sm:$0xff]
    %v655 = vld [vmem:[#allocation8 + $0x5e0] sm:$0xff]
    %v656 = vld [vmem:[#allocation8 + $0x5e8] sm:$0xff]
    %v657 = vld [vmem:[#allocation8 + $0x5f0] sm:$0xff]
    %v658 = vld [vmem:[#allocation8 + $0x5f8] sm:$0xff]
    %v659 = vld [vmem:[#allocation8 + $0x600] sm:$0xff]
    %v660 = vld [vmem:[#allocation8 + $0x608] sm:$0xff]
    %v661 = vld [vmem:[#allocation8 + $0x610] sm:$0xff]
    %v662 = vld [vmem:[#allocation8 + $0x618] sm:$0xff]
    %v663 = vld [vmem:[#allocation8 + $0x620] sm:$0xff]
    %v664 = vld [vmem:[#allocation8 + $0x628] sm:$0xff]
    %v665 = vld [vmem:[#allocation8 + $0x630] sm:$0xff]
    %v666 = vld [vmem:[#allocation8 + $0x638] sm:$0xff]
    %v667 = vld [vmem:[#allocation8 + $0x640] sm:$0xff]
    %v668 = vld [vmem:[#allocation8 + $0x648] sm:$0xff]
    %v669 = vld [vmem:[#allocation8 + $0x650] sm:$0xff]
    %v670 = vld [vmem:[#allocation8 + $0x658] sm:$0xff]
    %v671 = vld [vmem:[#allocation8 + $0x660] sm:$0xff]
    %v672 = vld [vmem:[#allocation8 + $0x668] sm:$0xff]
    %v673 = vld [vmem:[#allocation8 + $0x670] sm:$0xff]
    %v674 = vld [vmem:[#allocation8 + $0x678] sm:$0xff]
    %v675 = vld [vmem:[#allocation8 + $0x680] sm:$0xff]
    %v676 = vld [vmem:[#allocation8 + $0x688] sm:$0xff]
    %v677 = vld [vmem:[#allocation8 + $0x690] sm:$0xff]
    %v678 = vld [vmem:[#allocation8 + $0x698] sm:$0xff]
    %v679 = vld [vmem:[#allocation8 + $0x6a0] sm:$0xff]
    %v680 = vld [vmem:[#allocation8 + $0x6a8] sm:$0xff]
    %v681 = vld [vmem:[#allocation8 + $0x6b0] sm:$0xff]
    %v682 = vld [vmem:[#allocation8 + $0x6b8] sm:$0xff]
    %v683 = vld [vmem:[#allocation8 + $0x6c0] sm:$0xff]
    %v684 = vld [vmem:[#allocation8 + $0x6c8] sm:$0xff]
    %v685 = vld [vmem:[#allocation8 + $0x6d0] sm:$0xff]
    %v686 = vld [vmem:[#allocation8 + $0x6d8] sm:$0xff]
    %v687 = vld [vmem:[#allocation8 + $0x6e0] sm:$0xff]
    %v688 = vld [vmem:[#allocation8 + $0x6e8] sm:$0xff]
    %v689 = vld [vmem:[#allocation8 + $0x6f0] sm:$0xff]
    %v690 = vld [vmem:[#allocation8 + $0x6f8] sm:$0xff]
    %v691 = vld [vmem:[#allocation8 + $0x700] sm:$0xff]
    %v692 = vld [vmem:[#allocation8 + $0x708] sm:$0xff]
    %v693 = vld [vmem:[#allocation8 + $0x710] sm:$0xff]
    %v694 = vld [vmem:[#allocation8 + $0x718] sm:$0xff]
    %v695 = vld [vmem:[#allocation8 + $0x720] sm:$0xff]
    %v696 = vld [vmem:[#allocation8 + $0x728] sm:$0xff]
    %v697 = vld [vmem:[#allocation8 + $0x730] sm:$0xff]
    %v698 = vld [vmem:[#allocation8 + $0x738] sm:$0xff]
    %v699 = vld [vmem:[#allocation8 + $0x740] sm:$0xff]
    %v700 = vld [vmem:[#allocation8 + $0x748] sm:$0xff]
    %v701 = vld [vmem:[#allocation8 + $0x750] sm:$0xff]
    %v702 = vld [vmem:[#allocation8 + $0x758] sm:$0xff]
    %v703 = vld [vmem:[#allocation8 + $0x760] sm:$0xff]
    %v704 = vld [vmem:[#allocation8 + $0x768] sm:$0xff]
    %v705 = vld [vmem:[#allocation8 + $0x770] sm:$0xff]
    %v706 = vld [vmem:[#allocation8 + $0x778] sm:$0xff]
    %v707 = vld [vmem:[#allocation8 + $0x780] sm:$0xff]
    %v708 = vld [vmem:[#allocation8 + $0x788] sm:$0xff]
    %v709 = vld [vmem:[#allocation8 + $0x790] sm:$0xff]
    %v710 = vld [vmem:[#allocation8 + $0x798] sm:$0xff]
    %v711 = vld [vmem:[#allocation8 + $0x7a0] sm:$0xff]
    %v712 = vld [vmem:[#allocation8 + $0x7a8] sm:$0xff]
    %v713 = vld [vmem:[#allocation8 + $0x7b0] sm:$0xff]
    %v714 = vld [vmem:[#allocation8 + $0x7b8] sm:$0xff]
    %v715 = vld [vmem:[#allocation8 + $0x7c0] sm:$0xff]
    %v716 = vld [vmem:[#allocation8 + $0x7c8] sm:$0xff]
    %v717 = vld [vmem:[#allocation8 + $0x7d0] sm:$0xff]
    %v718 = vld [vmem:[#allocation8 + $0x7d8] sm:$0xff]
    %v719 = vld [vmem:[#allocation8 + $0x7e0] sm:$0xff]
    %v720 = vld [vmem:[#allocation8 + $0x7e8] sm:$0xff]
    %v721 = vld [vmem:[#allocation8 + $0x7f0] sm:$0xff]
    %v722 = vld [vmem:[#allocation8 + $0x7f8] sm:$0xff]
    %v723 = vld [vmem:[%s4] sm:$0xf]
    %v725 = vlaneseq
    %v726 = vshrl.u32 %v725, 7
    %v727 = vsub.s32 0, %v726
    %v728 = vrot.slane %v723, %v727
    %v729 = vlaneseq
    %v730 = vshrl.u32 %v729, 7
    %v731 = vsub.s32 1, %v730
    %v732 = vrot.slane %v723, %v731
    %v733 = vlaneseq
    %v734 = vshrl.u32 %v733, 7
    %v735 = vsub.s32 2, %v734
    %v736 = vrot.slane %v723, %v735
    %v737 = vlaneseq
    %v738 = vshrl.u32 %v737, 7
    %v739 = vsub.s32 3, %v738
    %v740 = vrot.slane %v723, %v739
    %v1001 = vunpack.c.l.b16 %v467
    %v1002 = vunpack.c.h.b16 %v467
    %v1003 = vunpack.c.l.b16 %v468
    %v1004 = vunpack.c.h.b16 %v468
    %v1005 = vunpack.c.l.b16 %v469
    %v1006 = vunpack.c.h.b16 %v469
    %v1007 = vunpack.c.l.b16 %v470
    %v1008 = vunpack.c.h.b16 %v470
    %v1009 = vunpack.c.l.b16 %v471
    %v1010 = vunpack.c.h.b16 %v471
    %v1011 = vunpack.c.l.b16 %v472
    %v1012 = vunpack.c.h.b16 %v472
    %v1013 = vunpack.c.l.b16 %v473
    %v1014 = vunpack.c.h.b16 %v473
    %v1015 = vunpack.c.l.b16 %v474
    %v1016 = vunpack.c.h.b16 %v474
    %v1017 = vunpack.c.l.b16 %v475
    %v1018 = vunpack.c.h.b16 %v475
    %v1019 = vunpack.c.l.b16 %v476
    %v1020 = vunpack.c.h.b16 %v476
    %v1021 = vunpack.c.l.b16 %v477
    %v1022 = vunpack.c.h.b16 %v477
    %v1023 = vunpack.c.l.b16 %v478
    %v1024 = vunpack.c.h.b16 %v478
    %v1025 = vunpack.c.l.b16 %v479
    %v1026 = vunpack.c.h.b16 %v479
    %v1027 = vunpack.c.l.b16 %v480
    %v1028 = vunpack.c.h.b16 %v480
    %v1029 = vunpack.c.l.b16 %v481
    %v1030 = vunpack.c.h.b16 %v481
    %v1031 = vunpack.c.l.b16 %v482
    %v1032 = vunpack.c.h.b16 %v482
    %v1033 = vunpack.c.l.b16 %v483
    %v1034 = vunpack.c.h.b16 %v483
    %v1035 = vunpack.c.l.b16 %v484
    %v1036 = vunpack.c.h.b16 %v484
    %v1037 = vunpack.c.l.b16 %v485
    %v1038 = vunpack.c.h.b16 %v485
    %v1039 = vunpack.c.l.b16 %v486
    %v1040 = vunpack.c.h.b16 %v486
    %v1041 = vunpack.c.l.b16 %v487
    %v1042 = vunpack.c.h.b16 %v487
    %v1043 = vunpack.c.l.b16 %v488
    %v1044 = vunpack.c.h.b16 %v488
    %v1045 = vunpack.c.l.b16 %v489
    %v1046 = vunpack.c.h.b16 %v489
    %v1047 = vunpack.c.l.b16 %v490
    %v1048 = vunpack.c.h.b16 %v490
    %v1049 = vunpack.c.l.b16 %v491
    %v1050 = vunpack.c.h.b16 %v491
    %v1051 = vunpack.c.l.b16 %v492
    %v1052 = vunpack.c.h.b16 %v492
    %v1053 = vunpack.c.l.b16 %v493
    %v1054 = vunpack.c.h.b16 %v493
    %v1055 = vunpack.c.l.b16 %v494
    %v1056 = vunpack.c.h.b16 %v494
    %v1057 = vunpack.c.l.b16 %v495
    %v1058 = vunpack.c.h.b16 %v495
    %v1059 = vunpack.c.l.b16 %v496
    %v1060 = vunpack.c.h.b16 %v496
    %v1061 = vunpack.c.l.b16 %v497
    %v1062 = vunpack.c.h.b16 %v497
    %v1063 = vunpack.c.l.b16 %v498
    %v1064 = vunpack.c.h.b16 %v498
    %v1065 = vunpack.c.l.b16 %v499
    %v1066 = vunpack.c.h.b16 %v499
    %v1067 = vunpack.c.l.b16 %v500
    %v1068 = vunpack.c.h.b16 %v500
    %v1069 = vunpack.c.l.b16 %v501
    %v1070 = vunpack.c.h.b16 %v501
    %v1071 = vunpack.c.l.b16 %v502
    %v1072 = vunpack.c.h.b16 %v502
    %v1073 = vunpack.c.l.b16 %v503
    %v1074 = vunpack.c.h.b16 %v503
    %v1075 = vunpack.c.l.b16 %v504
    %v1076 = vunpack.c.h.b16 %v504
    %v1077 = vunpack.c.l.b16 %v505
    %v1078 = vunpack.c.h.b16 %v505
    %v1079 = vunpack.c.l.b16 %v506
    %v1080 = vunpack.c.h.b16 %v506
    %v1081 = vunpack.c.l.b16 %v507
    %v1082 = vunpack.c.h.b16 %v507
    %v1083 = vunpack.c.l.b16 %v508
    %v1084 = vunpack.c.h.b16 %v508
    %v1085 = vunpack.c.l.b16 %v509
    %v1086 = vunpack.c.h.b16 %v509
    %v1087 = vunpack.c.l.b16 %v510
    %v1088 = vunpack.c.h.b16 %v510
    %v1089 = vunpack.c.l.b16 %v511
    %v1090 = vunpack.c.h.b16 %v511
    %v1091 = vunpack.c.l.b16 %v512
    %v1092 = vunpack.c.h.b16 %v512
    %v1093 = vunpack.c.l.b16 %v513
    %v1094 = vunpack.c.h.b16 %v513
    %v1095 = vunpack.c.l.b16 %v514
    %v1096 = vunpack.c.h.b16 %v514
    %v1097 = vunpack.c.l.b16 %v515
    %v1098 = vunpack.c.h.b16 %v515
    %v1099 = vunpack.c.l.b16 %v516
    %v1100 = vunpack.c.h.b16 %v516
    %v1101 = vunpack.c.l.b16 %v517
    %v1102 = vunpack.c.h.b16 %v517
    %v1103 = vunpack.c.l.b16 %v518
    %v1104 = vunpack.c.h.b16 %v518
    %v1105 = vunpack.c.l.b16 %v519
    %v1106 = vunpack.c.h.b16 %v519
    %v1107 = vunpack.c.l.b16 %v520
    %v1108 = vunpack.c.h.b16 %v520
    %v1109 = vunpack.c.l.b16 %v521
    %v1110 = vunpack.c.h.b16 %v521
    %v1111 = vunpack.c.l.b16 %v522
    %v1112 = vunpack.c.h.b16 %v522
    %v1113 = vunpack.c.l.b16 %v523
    %v1114 = vunpack.c.h.b16 %v523
    %v1115 = vunpack.c.l.b16 %v524
    %v1116 = vunpack.c.h.b16 %v524
    %v1117 = vunpack.c.l.b16 %v525
    %v1118 = vunpack.c.h.b16 %v525
    %v1119 = vunpack.c.l.b16 %v526
    %v1120 = vunpack.c.h.b16 %v526
    %v1121 = vunpack.c.l.b16 %v527
    %v1122 = vunpack.c.h.b16 %v527
    %v1123 = vunpack.c.l.b16 %v528
    %v1124 = vunpack.c.h.b16 %v528
    %v1125 = vunpack.c.l.b16 %v529
    %v1126 = vunpack.c.h.b16 %v529
    %v1127 = vunpack.c.l.b16 %v530
    %v1128 = vunpack.c.h.b16 %v530
    %v1129 = vunpack.c.l.b16 %v531
    %v1130 = vunpack.c.h.b16 %v531
    %v1131 = vunpack.c.l.b16 %v532
    %v1132 = vunpack.c.h.b16 %v532
    %v1133 = vunpack.c.l.b16 %v533
    %v1134 = vunpack.c.h.b16 %v533
    %v1135 = vunpack.c.l.b16 %v534
    %v1136 = vunpack.c.h.b16 %v534
    %v1137 = vunpack.c.l.b16 %v535
    %v1138 = vunpack.c.h.b16 %v535
    %v1139 = vunpack.c.l.b16 %v536
    %v1140 = vunpack.c.h.b16 %v536
    %v1141 = vunpack.c.l.b16 %v537
    %v1142 = vunpack.c.h.b16 %v537
    %v1143 = vunpack.c.l.b16 %v538
    %v1144 = vunpack.c.h.b16 %v538
    %v1145 = vunpack.c.l.b16 %v539
    %v1146 = vunpack.c.h.b16 %v539
    %v1147 = vunpack.c.l.b16 %v540
    %v1148 = vunpack.c.h.b16 %v540
    %v1149 = vunpack.c.l.b16 %v541
    %v1150 = vunpack.c.h.b16 %v541
    %v1151 = vunpack.c.l.b16 %v542
    %v1152 = vunpack.c.h.b16 %v542
    %v1153 = vunpack.c.l.b16 %v543
    %v1154 = vunpack.c.h.b16 %v543
    %v1155 = vunpack.c.l.b16 %v544
    %v1156 = vunpack.c.h.b16 %v544
    %v1157 = vunpack.c.l.b16 %v545
    %v1158 = vunpack.c.h.b16 %v545
    %v1159 = vunpack.c.l.b16 %v546
    %v1160 = vunpack.c.h.b16 %v546
    %v1161 = vunpack.c.l.b16 %v547
    %v1162 = vunpack.c.h.b16 %v547
    %v1163 = vunpack.c.l.b16 %v548
    %v1164 = vunpack.c.h.b16 %v548
    %v1165 = vunpack.c.l.b16 %v549
    %v1166 = vunpack.c.h.b16 %v549
    %v1167 = vunpack.c.l.b16 %v550
    %v1168 = vunpack.c.h.b16 %v550
    %v1169 = vunpack.c.l.b16 %v551
    %v1170 = vunpack.c.h.b16 %v551
    %v1171 = vunpack.c.l.b16 %v552
    %v1172 = vunpack.c.h.b16 %v552
    %v1173 = vunpack.c.l.b16 %v553
    %v1174 = vunpack.c.h.b16 %v553
    %v1175 = vunpack.c.l.b16 %v554
    %v1176 = vunpack.c.h.b16 %v554
    %v1177 = vunpack.c.l.b16 %v555
    %v1178 = vunpack.c.h.b16 %v555
    %v1179 = vunpack.c.l.b16 %v556
    %v1180 = vunpack.c.h.b16 %v556
    %v1181 = vunpack.c.l.b16 %v557
    %v1182 = vunpack.c.h.b16 %v557
    %v1183 = vunpack.c.l.b16 %v558
    %v1184 = vunpack.c.h.b16 %v558
    %v1185 = vunpack.c.l.b16 %v559
    %v1186 = vunpack.c.h.b16 %v559
    %v1187 = vunpack.c.l.b16 %v560
    %v1188 = vunpack.c.h.b16 %v560
    %v1189 = vunpack.c.l.b16 %v561
    %v1190 = vunpack.c.h.b16 %v561
    %v1191 = vunpack.c.l.b16 %v562
    %v1192 = vunpack.c.h.b16 %v562
    %v1193 = vunpack.c.l.b16 %v563
    %v1194 = vunpack.c.h.b16 %v563
    %v1195 = vunpack.c.l.b16 %v564
    %v1196 = vunpack.c.h.b16 %v564
    %v1197 = vunpack.c.l.b16 %v565
    %v1198 = vunpack.c.h.b16 %v565
    %v1199 = vunpack.c.l.b16 %v566
    %v1200 = vunpack.c.h.b16 %v566
    %v1201 = vunpack.c.l.b16 %v567
    %v1202 = vunpack.c.h.b16 %v567
    %v1203 = vunpack.c.l.b16 %v568
    %v1204 = vunpack.c.h.b16 %v568
    %v1205 = vunpack.c.l.b16 %v569
    %v1206 = vunpack.c.h.b16 %v569
    %v1207 = vunpack.c.l.b16 %v570
    %v1208 = vunpack.c.h.b16 %v570
    %v1209 = vunpack.c.l.b16 %v571
    %v1210 = vunpack.c.h.b16 %v571
    %v1211 = vunpack.c.l.b16 %v572
    %v1212 = vunpack.c.h.b16 %v572
    %v1213 = vunpack.c.l.b16 %v573
    %v1214 = vunpack.c.h.b16 %v573
    %v1215 = vunpack.c.l.b16 %v574
    %v1216 = vunpack.c.h.b16 %v574
    %v1217 = vunpack.c.l.b16 %v575
    %v1218 = vunpack.c.h.b16 %v575
    %v1219 = vunpack.c.l.b16 %v576
    %v1220 = vunpack.c.h.b16 %v576
    %v1221 = vunpack.c.l.b16 %v577
    %v1222 = vunpack.c.h.b16 %v577
    %v1223 = vunpack.c.l.b16 %v578
    %v1224 = vunpack.c.h.b16 %v578
    %v1225 = vunpack.c.l.b16 %v579
    %v1226 = vunpack.c.h.b16 %v579
    %v1227 = vunpack.c.l.b16 %v580
    %v1228 = vunpack.c.h.b16 %v580
    %v1229 = vunpack.c.l.b16 %v581
    %v1230 = vunpack.c.h.b16 %v581
    %v1231 = vunpack.c.l.b16 %v582
    %v1232 = vunpack.c.h.b16 %v582
    %v1233 = vunpack.c.l.b16 %v583
    %v1234 = vunpack.c.h.b16 %v583
    %v1235 = vunpack.c.l.b16 %v584
    %v1236 = vunpack.c.h.b16 %v584
    %v1237 = vunpack.c.l.b16 %v585
    %v1238 = vunpack.c.h.b16 %v585
    %v1239 = vunpack.c.l.b16 %v586
    %v1240 = vunpack.c.h.b16 %v586
    %v1241 = vunpack.c.l.b16 %v587
    %v1242 = vunpack.c.h.b16 %v587
    %v1243 = vunpack.c.l.b16 %v588
    %v1244 = vunpack.c.h.b16 %v588
    %v1245 = vunpack.c.l.b16 %v589
    %v1246 = vunpack.c.h.b16 %v589
    %v1247 = vunpack.c.l.b16 %v590
    %v1248 = vunpack.c.h.b16 %v590
    %v1249 = vunpack.c.l.b16 %v591
    %v1250 = vunpack.c.h.b16 %v591
    %v1251 = vunpack.c.l.b16 %v592
    %v1252 = vunpack.c.h.b16 %v592
    %v1253 = vunpack.c.l.b16 %v593
    %v1254 = vunpack.c.h.b16 %v593
    %v1255 = vunpack.c.l.b16 %v594
    %v1256 = vunpack.c.h.b16 %v594
    %v1257 = vunpack.c.l.b16 %v595
    %v1258 = vunpack.c.h.b16 %v595
    %v1259 = vunpack.c.l.b16 %v596
    %v1260 = vunpack.c.h.b16 %v596
    %v1261 = vunpack.c.l.b16 %v597
    %v1262 = vunpack.c.h.b16 %v597
    %v1263 = vunpack.c.l.b16 %v598
    %v1264 = vunpack.c.h.b16 %v598
    %v1265 = vunpack.c.l.b16 %v599
    %v1266 = vunpack.c.h.b16 %v599
    %v1267 = vunpack.c.l.b16 %v600
    %v1268 = vunpack.c.h.b16 %v600
    %v1269 = vunpack.c.l.b16 %v601
    %v1270 = vunpack.c.h.b16 %v601
    %v1271 = vunpack.c.l.b16 %v602
    %v1272 = vunpack.c.h.b16 %v602
    %v1273 = vunpack.c.l.b16 %v603
    %v1274 = vunpack.c.h.b16 %v603
    %v1275 = vunpack.c.l.b16 %v604
    %v1276 = vunpack.c.h.b16 %v604
    %v1277 = vunpack.c.l.b16 %v605
    %v1278 = vunpack.c.h.b16 %v605
    %v1279 = vunpack.c.l.b16 %v606
    %v1280 = vunpack.c.h.b16 %v606
    %v1281 = vunpack.c.l.b16 %v607
    %v1282 = vunpack.c.h.b16 %v607
    %v1283 = vunpack.c.l.b16 %v608
    %v1284 = vunpack.c.h.b16 %v608
    %v1285 = vunpack.c.l.b16 %v609
    %v1286 = vunpack.c.h.b16 %v609
    %v1287 = vunpack.c.l.b16 %v610
    %v1288 = vunpack.c.h.b16 %v610
    %v1289 = vunpack.c.l.b16 %v611
    %v1290 = vunpack.c.h.b16 %v611
    %v1291 = vunpack.c.l.b16 %v612
    %v1292 = vunpack.c.h.b16 %v612
    %v1293 = vunpack.c.l.b16 %v613
    %v1294 = vunpack.c.h.b16 %v613
    %v1295 = vunpack.c.l.b16 %v614
    %v1296 = vunpack.c.h.b16 %v614
    %v1297 = vunpack.c.l.b16 %v615
    %v1298 = vunpack.c.h.b16 %v615
    %v1299 = vunpack.c.l.b16 %v616
    %v1300 = vunpack.c.h.b16 %v616
    %v1301 = vunpack.c.l.b16 %v617
    %v1302 = vunpack.c.h.b16 %v617
    %v1303 = vunpack.c.l.b16 %v618
    %v1304 = vunpack.c.h.b16 %v618
    %v1305 = vunpack.c.l.b16 %v619
    %v1306 = vunpack.c.h.b16 %v619
    %v1307 = vunpack.c.l.b16 %v620
    %v1308 = vunpack.c.h.b16 %v620
    %v1309 = vunpack.c.l.b16 %v621
    %v1310 = vunpack.c.h.b16 %v621
    %v1311 = vunpack.c.l.b16 %v622
    %v1312 = vunpack.c.h.b16 %v622
    %v1313 = vunpack.c.l.b16 %v623
    %v1314 = vunpack.c.h.b16 %v623
    %v1315 = vunpack.c.l.b16 %v624
    %v1316 = vunpack.c.h.b16 %v624
    %v1317 = vunpack.c.l.b16 %v625
    %v1318 = vunpack.c.h.b16 %v625
    %v1319 = vunpack.c.l.b16 %v626
    %v1320 = vunpack.c.h.b16 %v626
    %v1321 = vunpack.c.l.b16 %v627
    %v1322 = vunpack.c.h.b16 %v627
    %v1323 = vunpack.c.l.b16 %v628
    %v1324 = vunpack.c.h.b16 %v628
    %v1325 = vunpack.c.l.b16 %v629
    %v1326 = vunpack.c.h.b16 %v629
    %v1327 = vunpack.c.l.b16 %v630
    %v1328 = vunpack.c.h.b16 %v630
    %v1329 = vunpack.c.l.b16 %v631
    %v1330 = vunpack.c.h.b16 %v631
    %v1331 = vunpack.c.l.b16 %v632
    %v1332 = vunpack.c.h.b16 %v632
    %v1333 = vunpack.c.l.b16 %v633
    %v1334 = vunpack.c.h.b16 %v633
    %v1335 = vunpack.c.l.b16 %v634
    %v1336 = vunpack.c.h.b16 %v634
    %v1337 = vunpack.c.l.b16 %v635
    %v1338 = vunpack.c.h.b16 %v635
    %v1339 = vunpack.c.l.b16 %v636
    %v1340 = vunpack.c.h.b16 %v636
    %v1341 = vunpack.c.l.b16 %v637
    %v1342 = vunpack.c.h.b16 %v637
    %v1343 = vunpack.c.l.b16 %v638
    %v1344 = vunpack.c.h.b16 %v638
    %v1345 = vunpack.c.l.b16 %v639
    %v1346 = vunpack.c.h.b16 %v639
    %v1347 = vunpack.c.l.b16 %v640
    %v1348 = vunpack.c.h.b16 %v640
    %v1349 = vunpack.c.l.b16 %v641
    %v1350 = vunpack.c.h.b16 %v641
    %v1351 = vunpack.c.l.b16 %v642
    %v1352 = vunpack.c.h.b16 %v642
    %v1353 = vunpack.c.l.b16 %v643
    %v1354 = vunpack.c.h.b16 %v643
    %v1355 = vunpack.c.l.b16 %v644
    %v1356 = vunpack.c.h.b16 %v644
    %v1357 = vunpack.c.l.b16 %v645
    %v1358 = vunpack.c.h.b16 %v645
    %v1359 = vunpack.c.l.b16 %v646
    %v1360 = vunpack.c.h.b16 %v646
    %v1361 = vunpack.c.l.b16 %v647
    %v1362 = vunpack.c.h.b16 %v647
    %v1363 = vunpack.c.l.b16 %v648
    %v1364 = vunpack.c.h.b16 %v648
    %v1365 = vunpack.c.l.b16 %v649
    %v1366 = vunpack.c.h.b16 %v649
    %v1367 = vunpack.c.l.b16 %v650
    %v1368 = vunpack.c.h.b16 %v650
    %v1369 = vunpack.c.l.b16 %v651
    %v1370 = vunpack.c.h.b16 %v651
    %v1371 = vunpack.c.l.b16 %v652
    %v1372 = vunpack.c.h.b16 %v652
    %v1373 = vunpack.c.l.b16 %v653
    %v1374 = vunpack.c.h.b16 %v653
    %v1375 = vunpack.c.l.b16 %v654
    %v1376 = vunpack.c.h.b16 %v654
    %v1377 = vunpack.c.l.b16 %v655
    %v1378 = vunpack.c.h.b16 %v655
    %v1379 = vunpack.c.l.b16 %v656
    %v1380 = vunpack.c.h.b16 %v656
    %v1381 = vunpack.c.l.b16 %v657
    %v1382 = vunpack.c.h.b16 %v657
    %v1383 = vunpack.c.l.b16 %v658
    %v1384 = vunpack.c.h.b16 %v658
    %v1385 = vunpack.c.l.b16 %v659
    %v1386 = vunpack.c.h.b16 %v659
    %v1387 = vunpack.c.l.b16 %v660
    %v1388 = vunpack.c.h.b16 %v660
    %v1389 = vunpack.c.l.b16 %v661
    %v1390 = vunpack.c.h.b16 %v661
    %v1391 = vunpack.c.l.b16 %v662
    %v1392 = vunpack.c.h.b16 %v662
    %v1393 = vunpack.c.l.b16 %v663
    %v1394 = vunpack.c.h.b16 %v663
    %v1395 = vunpack.c.l.b16 %v664
    %v1396 = vunpack.c.h.b16 %v664
    %v1397 = vunpack.c.l.b16 %v665
    %v1398 = vunpack.c.h.b16 %v665
    %v1399 = vunpack.c.l.b16 %v666
    %v1400 = vunpack.c.h.b16 %v666
    %v1401 = vunpack.c.l.b16 %v667
    %v1402 = vunpack.c.h.b16 %v667
    %v1403 = vunpack.c.l.b16 %v668
    %v1404 = vunpack.c.h.b16 %v668
    %v1405 = vunpack.c.l.b16 %v669
    %v1406 = vunpack.c.h.b16 %v669
    %v1407 = vunpack.c.l.b16 %v670
    %v1408 = vunpack.c.h.b16 %v670
    %v1409 = vunpack.c.l.b16 %v671
    %v1410 = vunpack.c.h.b16 %v671
    %v1411 = vunpack.c.l.b16 %v672
    %v1412 = vunpack.c.h.b16 %v672
    %v1413 = vunpack.c.l.b16 %v673
    %v1414 = vunpack.c.h.b16 %v673
    %v1415 = vunpack.c.l.b16 %v674
    %v1416 = vunpack.c.h.b16 %v674
    %v1417 = vunpack.c.l.b16 %v675
    %v1418 = vunpack.c.h.b16 %v675
    %v1419 = vunpack.c.l.b16 %v676
    %v1420 = vunpack.c.h.b16 %v676
    %v1421 = vunpack.c.l.b16 %v677
    %v1422 = vunpack.c.h.b16 %v677
    %v1423 = vunpack.c.l.b16 %v678
    %v1424 = vunpack.c.h.b16 %v678
    %v1425 = vunpack.c.l.b16 %v679
    %v1426 = vunpack.c.h.b16 %v679
    %v1427 = vunpack.c.l.b16 %v680
    %v1428 = vunpack.c.h.b16 %v680
    %v1429 = vunpack.c.l.b16 %v681
    %v1430 = vunpack.c.h.b16 %v681
    %v1431 = vunpack.c.l.b16 %v682
    %v1432 = vunpack.c.h.b16 %v682
    %v1433 = vunpack.c.l.b16 %v683
    %v1434 = vunpack.c.h.b16 %v683
    %v1435 = vunpack.c.l.b16 %v684
    %v1436 = vunpack.c.h.b16 %v684
    %v1437 = vunpack.c.l.b16 %v685
    %v1438 = vunpack.c.h.b16 %v685
    %v1439 = vunpack.c.l.b16 %v686
    %v1440 = vunpack.c.h.b16 %v686
    %v1441 = vunpack.c.l.b16 %v687
    %v1442 = vunpack.c.h.b16 %v687
    %v1443 = vunpack.c.l.b16 %v688
    %v1444 = vunpack.c.h.b16 %v688
    %v1445 = vunpack.c.l.b16 %v689
    %v1446 = vunpack.c.h.b16 %v689
    %v1447 = vunpack.c.l.b16 %v690
    %v1448 = vunpack.c.h.b16 %v690
    %v1449 = vunpack.c.l.b16 %v691
    %v1450 = vunpack.c.h.b16 %v691
    %v1451 = vunpack.c.l.b16 %v692
    %v1452 = vunpack.c.h.b16 %v692
    %v1453 = vunpack.c.l.b16 %v693
    %v1454 = vunpack.c.h.b16 %v693
    %v1455 = vunpack.c.l.b16 %v694
    %v1456 = vunpack.c.h.b16 %v694
    %v1457 = vunpack.c.l.b16 %v695
    %v1458 = vunpack.c.h.b16 %v695
    %v1459 = vunpack.c.l.b16 %v696
    %v1460 = vunpack.c.h.b16 %v696
    %v1461 = vunpack.c.l.b16 %v697
    %v1462 = vunpack.c.h.b16 %v697
    %v1463 = vunpack.c.l.b16 %v698
    %v1464 = vunpack.c.h.b16 %v698
    %v1465 = vunpack.c.l.b16 %v699
    %v1466 = vunpack.c.h.b16 %v699
    %v1467 = vunpack.c.l.b16 %v700
    %v1468 = vunpack.c.h.b16 %v700
    %v1469 = vunpack.c.l.b16 %v701
    %v1470 = vunpack.c.h.b16 %v701
    %v1471 = vunpack.c.l.b16 %v702
    %v1472 = vunpack.c.h.b16 %v702
    %v1473 = vunpack.c.l.b16 %v703
    %v1474 = vunpack.c.h.b16 %v703
    %v1475 = vunpack.c.l.b16 %v704
    %v1476 = vunpack.c.h.b16 %v704
    %v1477 = vunpack.c.l.b16 %v705
    %v1478 = vunpack.c.h.b16 %v705
    %v1479 = vunpack.c.l.b16 %v706
    %v1480 = vunpack.c.h.b16 %v706
    %v1481 = vunpack.c.l.b16 %v707
    %v1482 = vunpack.c.h.b16 %v707
    %v1483 = vunpack.c.l.b16 %v708
    %v1484 = vunpack.c.h.b16 %v708
    %v1485 = vunpack.c.l.b16 %v709
    %v1486 = vunpack.c.h.b16 %v709
    %v1487 = vunpack.c.l.b16 %v710
    %v1488 = vunpack.c.h.b16 %v710
    %v1489 = vunpack.c.l.b16 %v711
    %v1490 = vunpack.c.h.b16 %v711
    %v1491 = vunpack.c.l.b16 %v712
    %v1492 = vunpack.c.h.b16 %v712
    %v1493 = vunpack.c.l.b16 %v713
    %v1494 = vunpack.c.h.b16 %v713
    %v1495 = vunpack.c.l.b16 %v714
    %v1496 = vunpack.c.h.b16 %v714
    %v1497 = vunpack.c.l.b16 %v715
    %v1498 = vunpack.c.h.b16 %v715
    %v1499 = vunpack.c.l.b16 %v716
    %v1500 = vunpack.c.h.b16 %v716
    %v1501 = vunpack.c.l.b16 %v717
    %v1502 = vunpack.c.h.b16 %v717
    %v1503 = vunpack.c.l.b16 %v718
    %v1504 = vunpack.c.h.b16 %v718
    %v1505 = vunpack.c.l.b16 %v719
    %v1506 = vunpack.c.h.b16 %v719
    %v1507 = vunpack.c.l.b16 %v720
    %v1508 = vunpack.c.h.b16 %v720
    %v1509 = vunpack.c.l.b16 %v721
    %v1510 = vunpack.c.h.b16 %v721
    %v1511 = vunpack.c.l.b16 %v722
    %v1512 = vunpack.c.h.b16 %v722
    %v1513 = vpack.c.b16 %v1005, %v1001
    %v1514 = vpack.c.b16 %v1006, %v1002
    %v1515 = vpack.c.b16 %v1007, %v1003
    %v1516 = vpack.c.b16 %v1008, %v1004
    %v1517 = vpack.c.b16 %v1013, %v1009
    %v1518 = vpack.c.b16 %v1014, %v1010
    %v1519 = vpack.c.b16 %v1015, %v1011
    %v1520 = vpack.c.b16 %v1016, %v1012
    %v1521 = vpack.c.b16 %v1021, %v1017
    %v1522 = vpack.c.b16 %v1022, %v1018
    %v1523 = vpack.c.b16 %v1023, %v1019
    %v1524 = vpack.c.b16 %v1024, %v1020
    %v1525 = vpack.c.b16 %v1029, %v1025
    %v1526 = vpack.c.b16 %v1030, %v1026
    %v1527 = vpack.c.b16 %v1031, %v1027
    %v1528 = vpack.c.b16 %v1032, %v1028
    %v1529 = vpack.c.b16 %v1037, %v1033
    %v1530 = vpack.c.b16 %v1038, %v1034
    %v1531 = vpack.c.b16 %v1039, %v1035
    %v1532 = vpack.c.b16 %v1040, %v1036
    %v1533 = vpack.c.b16 %v1045, %v1041
    %v1534 = vpack.c.b16 %v1046, %v1042
    %v1535 = vpack.c.b16 %v1047, %v1043
    %v1536 = vpack.c.b16 %v1048, %v1044
    %v1537 = vpack.c.b16 %v1053, %v1049
    %v1538 = vpack.c.b16 %v1054, %v1050
    %v1539 = vpack.c.b16 %v1055, %v1051
    %v1540 = vpack.c.b16 %v1056, %v1052
    %v1541 = vpack.c.b16 %v1061, %v1057
    %v1542 = vpack.c.b16 %v1062, %v1058
    %v1543 = vpack.c.b16 %v1063, %v1059
    %v1544 = vpack.c.b16 %v1064, %v1060
    %v1545 = vpack.c.b16 %v1069, %v1065
    %v1546 = vpack.c.b16 %v1070, %v1066
    %v1547 = vpack.c.b16 %v1071, %v1067
    %v1548 = vpack.c.b16 %v1072, %v1068
    %v1549 = vpack.c.b16 %v1077, %v1073
    %v1550 = vpack.c.b16 %v1078, %v1074
    %v1551 = vpack.c.b16 %v1079, %v1075
    %v1552 = vpack.c.b16 %v1080, %v1076
    %v1553 = vpack.c.b16 %v1085, %v1081
    %v1554 = vpack.c.b16 %v1086, %v1082
    %v1555 = vpack.c.b16 %v1087, %v1083
    %v1556 = vpack.c.b16 %v1088, %v1084
    %v1557 = vpack.c.b16 %v1093, %v1089
    %v1558 = vpack.c.b16 %v1094, %v1090
    %v1559 = vpack.c.b16 %v1095, %v1091
    %v1560 = vpack.c.b16 %v1096, %v1092
    %v1561 = vpack.c.b16 %v1101, %v1097
    %v1562 = vpack.c.b16 %v1102, %v1098
    %v1563 = vpack.c.b16 %v1103, %v1099
    %v1564 = vpack.c.b16 %v1104, %v1100
    %v1565 = vpack.c.b16 %v1109, %v1105
    %v1566 = vpack.c.b16 %v1110, %v1106
    %v1567 = vpack.c.b16 %v1111, %v1107
    %v1568 = vpack.c.b16 %v1112, %v1108
    %v1569 = vpack.c.b16 %v1117, %v1113
    %v1570 = vpack.c.b16 %v1118, %v1114
    %v1571 = vpack.c.b16 %v1119, %v1115
    %v1572 = vpack.c.b16 %v1120, %v1116
    %v1573 = vpack.c.b16 %v1125, %v1121
    %v1574 = vpack.c.b16 %v1126, %v1122
    %v1575 = vpack.c.b16 %v1127, %v1123
    %v1576 = vpack.c.b16 %v1128, %v1124
    %v1577 = vpack.c.b16 %v1133, %v1129
    %v1578 = vpack.c.b16 %v1134, %v1130
    %v1579 = vpack.c.b16 %v1135, %v1131
    %v1580 = vpack.c.b16 %v1136, %v1132
    %v1581 = vpack.c.b16 %v1141, %v1137
    %v1582 = vpack.c.b16 %v1142, %v1138
    %v1583 = vpack.c.b16 %v1143, %v1139
    %v1584 = vpack.c.b16 %v1144, %v1140
    %v1585 = vpack.c.b16 %v1149, %v1145
    %v1586 = vpack.c.b16 %v1150, %v1146
    %v1587 = vpack.c.b16 %v1151, %v1147
    %v1588 = vpack.c.b16 %v1152, %v1148
    %v1589 = vpack.c.b16 %v1157, %v1153
    %v1590 = vpack.c.b16 %v1158, %v1154
    %v1591 = vpack.c.b16 %v1159, %v1155
    %v1592 = vpack.c.b16 %v1160, %v1156
    %v1593 = vpack.c.b16 %v1165, %v1161
    %v1594 = vpack.c.b16 %v1166, %v1162
    %v1595 = vpack.c.b16 %v1167, %v1163
    %v1596 = vpack.c.b16 %v1168, %v1164
    %v1597 = vpack.c.b16 %v1173, %v1169
    %v1598 = vpack.c.b16 %v1174, %v1170
    %v1599 = vpack.c.b16 %v1175, %v1171
    %v1600 = vpack.c.b16 %v1176, %v1172
    %v1601 = vpack.c.b16 %v1181, %v1177
    %v1602 = vpack.c.b16 %v1182, %v1178
    %v1603 = vpack.c.b16 %v1183, %v1179
    %v1604 = vpack.c.b16 %v1184, %v1180
    %v1605 = vpack.c.b16 %v1189, %v1185
    %v1606 = vpack.c.b16 %v1190, %v1186
    %v1607 = vpack.c.b16 %v1191, %v1187
    %v1608 = vpack.c.b16 %v1192, %v1188
    %v1609 = vpack.c.b16 %v1197, %v1193
    %v1610 = vpack.c.b16 %v1198, %v1194
    %v1611 = vpack.c.b16 %v1199, %v1195
    %v1612 = vpack.c.b16 %v1200, %v1196
    %v1613 = vpack.c.b16 %v1205, %v1201
    %v1614 = vpack.c.b16 %v1206, %v1202
    %v1615 = vpack.c.b16 %v1207, %v1203
    %v1616 = vpack.c.b16 %v1208, %v1204
    %v1617 = vpack.c.b16 %v1213, %v1209
    %v1618 = vpack.c.b16 %v1214, %v1210
    %v1619 = vpack.c.b16 %v1215, %v1211
    %v1620 = vpack.c.b16 %v1216, %v1212
    %v1621 = vpack.c.b16 %v1221, %v1217
    %v1622 = vpack.c.b16 %v1222, %v1218
    %v1623 = vpack.c.b16 %v1223, %v1219
    %v1624 = vpack.c.b16 %v1224, %v1220
    %v1625 = vpack.c.b16 %v1229, %v1225
    %v1626 = vpack.c.b16 %v1230, %v1226
    %v1627 = vpack.c.b16 %v1231, %v1227
    %v1628 = vpack.c.b16 %v1232, %v1228
    %v1629 = vpack.c.b16 %v1237, %v1233
    %v1630 = vpack.c.b16 %v1238, %v1234
    %v1631 = vpack.c.b16 %v1239, %v1235
    %v1632 = vpack.c.b16 %v1240, %v1236
    %v1633 = vpack.c.b16 %v1245, %v1241
    %v1634 = vpack.c.b16 %v1246, %v1242
    %v1635 = vpack.c.b16 %v1247, %v1243
    %v1636 = vpack.c.b16 %v1248, %v1244
    %v1637 = vpack.c.b16 %v1253, %v1249
    %v1638 = vpack.c.b16 %v1254, %v1250
    %v1639 = vpack.c.b16 %v1255, %v1251
    %v1640 = vpack.c.b16 %v1256, %v1252
    %v1641 = vpack.c.b16 %v1261, %v1257
    %v1642 = vpack.c.b16 %v1262, %v1258
    %v1643 = vpack.c.b16 %v1263, %v1259
    %v1644 = vpack.c.b16 %v1264, %v1260
    %v1645 = vpack.c.b16 %v1269, %v1265
    %v1646 = vpack.c.b16 %v1270, %v1266
    %v1647 = vpack.c.b16 %v1271, %v1267
    %v1648 = vpack.c.b16 %v1272, %v1268
    %v1649 = vpack.c.b16 %v1277, %v1273
    %v1650 = vpack.c.b16 %v1278, %v1274
    %v1651 = vpack.c.b16 %v1279, %v1275
    %v1652 = vpack.c.b16 %v1280, %v1276
    %v1653 = vpack.c.b16 %v1285, %v1281
    %v1654 = vpack.c.b16 %v1286, %v1282
    %v1655 = vpack.c.b16 %v1287, %v1283
    %v1656 = vpack.c.b16 %v1288, %v1284
    %v1657 = vpack.c.b16 %v1293, %v1289
    %v1658 = vpack.c.b16 %v1294, %v1290
    %v1659 = vpack.c.b16 %v1295, %v1291
    %v1660 = vpack.c.b16 %v1296, %v1292
    %v1661 = vpack.c.b16 %v1301, %v1297
    %v1662 = vpack.c.b16 %v1302, %v1298
    %v1663 = vpack.c.b16 %v1303, %v1299
    %v1664 = vpack.c.b16 %v1304, %v1300
    %v1665 = vpack.c.b16 %v1309, %v1305
    %v1666 = vpack.c.b16 %v1310, %v1306
    %v1667 = vpack.c.b16 %v1311, %v1307
    %v1668 = vpack.c.b16 %v1312, %v1308
    %v1669 = vpack.c.b16 %v1317, %v1313
    %v1670 = vpack.c.b16 %v1318, %v1314
    %v1671 = vpack.c.b16 %v1319, %v1315
    %v1672 = vpack.c.b16 %v1320, %v1316
    %v1673 = vpack.c.b16 %v1325, %v1321
    %v1674 = vpack.c.b16 %v1326, %v1322
    %v1675 = vpack.c.b16 %v1327, %v1323
    %v1676 = vpack.c.b16 %v1328, %v1324
    %v1677 = vpack.c.b16 %v1333, %v1329
    %v1678 = vpack.c.b16 %v1334, %v1330
    %v1679 = vpack.c.b16 %v1335, %v1331
    %v1680 = vpack.c.b16 %v1336, %v1332
    %v1681 = vpack.c.b16 %v1341, %v1337
    %v1682 = vpack.c.b16 %v1342, %v1338
    %v1683 = vpack.c.b16 %v1343, %v1339
    %v1684 = vpack.c.b16 %v1344, %v1340
    %v1685 = vpack.c.b16 %v1349, %v1345
    %v1686 = vpack.c.b16 %v1350, %v1346
    %v1687 = vpack.c.b16 %v1351, %v1347
    %v1688 = vpack.c.b16 %v1352, %v1348
    %v1689 = vpack.c.b16 %v1357, %v1353
    %v1690 = vpack.c.b16 %v1358, %v1354
    %v1691 = vpack.c.b16 %v1359, %v1355
    %v1692 = vpack.c.b16 %v1360, %v1356
    %v1693 = vpack.c.b16 %v1365, %v1361
    %v1694 = vpack.c.b16 %v1366, %v1362
    %v1695 = vpack.c.b16 %v1367, %v1363
    %v1696 = vpack.c.b16 %v1368, %v1364
    %v1697 = vpack.c.b16 %v1373, %v1369
    %v1698 = vpack.c.b16 %v1374, %v1370
    %v1699 = vpack.c.b16 %v1375, %v1371
    %v1700 = vpack.c.b16 %v1376, %v1372
    %v1701 = vpack.c.b16 %v1381, %v1377
    %v1702 = vpack.c.b16 %v1382, %v1378
    %v1703 = vpack.c.b16 %v1383, %v1379
    %v1704 = vpack.c.b16 %v1384, %v1380
    %v1705 = vpack.c.b16 %v1389, %v1385
    %v1706 = vpack.c.b16 %v1390, %v1386
    %v1707 = vpack.c.b16 %v1391, %v1387
    %v1708 = vpack.c.b16 %v1392, %v1388
    %v1709 = vpack.c.b16 %v1397, %v1393
    %v1710 = vpack.c.b16 %v1398, %v1394
    %v1711 = vpack.c.b16 %v1399, %v1395
    %v1712 = vpack.c.b16 %v1400, %v1396
    %v1713 = vpack.c.b16 %v1405, %v1401
    %v1714 = vpack.c.b16 %v1406, %v1402
    %v1715 = vpack.c.b16 %v1407, %v1403
    %v1716 = vpack.c.b16 %v1408, %v1404
    %v1717 = vpack.c.b16 %v1413, %v1409
    %v1718 = vpack.c.b16 %v1414, %v1410
    %v1719 = vpack.c.b16 %v1415, %v1411
    %v1720 = vpack.c.b16 %v1416, %v1412
    %v1721 = vpack.c.b16 %v1421, %v1417
    %v1722 = vpack.c.b16 %v1422, %v1418
    %v1723 = vpack.c.b16 %v1423, %v1419
    %v1724 = vpack.c.b16 %v1424, %v1420
    %v1725 = vpack.c.b16 %v1429, %v1425
    %v1726 = vpack.c.b16 %v1430, %v1426
    %v1727 = vpack.c.b16 %v1431, %v1427
    %v1728 = vpack.c.b16 %v1432, %v1428
    %v1729 = vpack.c.b16 %v1437, %v1433
    %v1730 = vpack.c.b16 %v1438, %v1434
    %v1731 = vpack.c.b16 %v1439, %v1435
    %v1732 = vpack.c.b16 %v1440, %v1436
    %v1733 = vpack.c.b16 %v1445, %v1441
    %v1734 = vpack.c.b16 %v1446, %v1442
    %v1735 = vpack.c.b16 %v1447, %v1443
    %v1736 = vpack.c.b16 %v1448, %v1444
    %v1737 = vpack.c.b16 %v1453, %v1449
    %v1738 = vpack.c.b16 %v1454, %v1450
    %v1739 = vpack.c.b16 %v1455, %v1451
    %v1740 = vpack.c.b16 %v1456, %v1452
    %v1741 = vpack.c.b16 %v1461, %v1457
    %v1742 = vpack.c.b16 %v1462, %v1458
    %v1743 = vpack.c.b16 %v1463, %v1459
    %v1744 = vpack.c.b16 %v1464, %v1460
    %v1745 = vpack.c.b16 %v1469, %v1465
    %v1746 = vpack.c.b16 %v1470, %v1466
    %v1747 = vpack.c.b16 %v1471, %v1467
    %v1748 = vpack.c.b16 %v1472, %v1468
    %v1749 = vpack.c.b16 %v1477, %v1473
    %v1750 = vpack.c.b16 %v1478, %v1474
    %v1751 = vpack.c.b16 %v1479, %v1475
    %v1752 = vpack.c.b16 %v1480, %v1476
    %v1753 = vpack.c.b16 %v1485, %v1481
    %v1754 = vpack.c.b16 %v1486, %v1482
    %v1755 = vpack.c.b16 %v1487, %v1483
    %v1756 = vpack.c.b16 %v1488, %v1484
    %v1757 = vpack.c.b16 %v1493, %v1489
    %v1758 = vpack.c.b16 %v1494, %v1490
    %v1759 = vpack.c.b16 %v1495, %v1491
    %v1760 = vpack.c.b16 %v1496, %v1492
    %v1761 = vpack.c.b16 %v1501, %v1497
    %v1762 = vpack.c.b16 %v1502, %v1498
    %v1763 = vpack.c.b16 %v1503, %v1499
    %v1764 = vpack.c.b16 %v1504, %v1500
    %v1765 = vpack.c.b16 %v1509, %v1505
    %v1766 = vpack.c.b16 %v1510, %v1506
    %v1767 = vpack.c.b16 %v1511, %v1507
    %v1768 = vpack.c.b16 %v1512, %v1508
    %2025 = vmatprep.subr.bf16.mxu0 %v1514
    %2026 = vmatpush1.bf16.msra.mxu0 %v1513
    %2027 = vmatprep.subr.bf16.mxu0 %v1518
    %2028 = vmatpush1.bf16.msra.mxu0 %v1517
    %2029 = vmatprep.subr.bf16.mxu0 %v1522
    %2030 = vmatpush1.bf16.msra.mxu0 %v1521
    %2031 = vmatprep.subr.bf16.mxu0 %v1526
    %2032 = vmatpush1.bf16.msra.mxu0 %v1525
    %2033 = vmatprep.subr.bf16.mxu0 %v1530
    %2034 = vmatpush1.bf16.msra.mxu0 %v1529
    %2035 = vmatprep.subr.bf16.mxu0 %v1534
    %2036 = vmatpush1.bf16.msra.mxu0 %v1533
    %2037 = vmatprep.subr.bf16.mxu0 %v1538
    %2038 = vmatpush1.bf16.msra.mxu0 %v1537
    %2039 = vmatprep.subr.bf16.mxu0 %v1542
    %2040 = vmatpush1.bf16.msra.mxu0 %v1541
    %2041 = vmatprep.subr.bf16.mxu0 %v1546
    %2042 = vmatpush1.bf16.msra.mxu0 %v1545
    %2043 = vmatprep.subr.bf16.mxu0 %v1550
    %2044 = vmatpush1.bf16.msra.mxu0 %v1549
    %2045 = vmatprep.subr.bf16.mxu0 %v1554
    %2046 = vmatpush1.bf16.msra.mxu0 %v1553
    %2047 = vmatprep.subr.bf16.mxu0 %v1558
    %2048 = vmatpush1.bf16.msra.mxu0 %v1557
    %2049 = vmatprep.subr.bf16.mxu0 %v1562
    %2050 = vmatpush1.bf16.msra.mxu0 %v1561
    %2051 = vmatprep.subr.bf16.mxu0 %v1566
    %2052 = vmatpush1.bf16.msra.mxu0 %v1565
    %2053 = vmatprep.subr.bf16.mxu0 %v1570
    %2054 = vmatpush1.bf16.msra.mxu0 %v1569
    %2055 = vmatprep.subr.bf16.mxu0 %v1574
    %2056 = vmatpush1.bf16.msra.mxu0 %v1573
    %2057 = vmatprep.mubr.bf16.mxu0 %v460
    %2058 = vmatmul.mubr.bf16.gmra.mrb[0].mxu0 %v459
    %v2059 = vpop.f32.mrb[0].mxu0
    %v2060 = vadd.f32 %v728, %v2059
    %v2061 = vpop.f32.mrb[0].mxu0
    %v2062 = vadd.f32 %v732, %v2061
    %v2063 = vpop.f32.mrb[0].mxu0
    %v2064 = vpop.f32.mrb[0].mxu0
    %2065 = vdwg.mxu0
    %2066 = vmatprep.subr.bf16.mxu0 %v1578
    %2067 = vmatpush1.bf16.msra.mxu0 %v1577
    %2068 = vmatprep.subr.bf16.mxu0 %v1582
    %2069 = vmatpush1.bf16.msra.mxu0 %v1581
    %2070 = vmatprep.subr.bf16.mxu0 %v1586
    %2071 = vmatpush1.bf16.msra.mxu0 %v1585
    %2072 = vmatprep.subr.bf16.mxu0 %v1590
    %2073 = vmatpush1.bf16.msra.mxu0 %v1589
    %2074 = vmatprep.subr.bf16.mxu0 %v1594
    %2075 = vmatpush1.bf16.msra.mxu0 %v1593
    %2076 = vmatprep.subr.bf16.mxu0 %v1598
    %2077 = vmatpush1.bf16.msra.mxu0 %v1597
    %2078 = vmatprep.subr.bf16.mxu0 %v1602
    %2079 = vmatpush1.bf16.msra.mxu0 %v1601
    %2080 = vmatprep.subr.bf16.mxu0 %v1606
    %2081 = vmatpush1.bf16.msra.mxu0 %v1605
    %2082 = vmatprep.subr.bf16.mxu0 %v1610
    %2083 = vmatpush1.bf16.msra.mxu0 %v1609
    %2084 = vmatprep.subr.bf16.mxu0 %v1614
    %2085 = vmatpush1.bf16.msra.mxu0 %v1613
    %2086 = vmatprep.subr.bf16.mxu0 %v1618
    %2087 = vmatpush1.bf16.msra.mxu0 %v1617
    %2088 = vmatprep.subr.bf16.mxu0 %v1622
    %2089 = vmatpush1.bf16.msra.mxu0 %v1621
    %2090 = vmatprep.subr.bf16.mxu0 %v1626
    %2091 = vmatpush1.bf16.msra.mxu0 %v1625
    %2092 = vmatprep.subr.bf16.mxu0 %v1630
    %2093 = vmatpush1.bf16.msra.mxu0 %v1629
    %2094 = vmatprep.subr.bf16.mxu0 %v1634
    %2095 = vmatpush1.bf16.msra.mxu0 %v1633
    %2096 = vmatprep.subr.bf16.mxu0 %v1638
    %2097 = vmatpush1.bf16.msra.mxu0 %v1637
    %2098 = vmatprep.mubr.bf16.mxu0 %v462
    %2099 = vmatmul.mubr.bf16.gmra.mrb[0].mxu0 %v461
    %v2100 = vpop.f32.mrb[0].mxu0
    %v2101 = vadd.f32 %v2060, %v2100
    %v2102 = vpop.f32.mrb[0].mxu0
    %v2103 = vadd.f32 %v2062, %v2102
    %v2104 = vpop.f32.mrb[0].mxu0
    %v2105 = vpop.f32.mrb[0].mxu0
    %2106 = vdwg.mxu0
    %2107 = vmatprep.subr.bf16.mxu0 %v1642
    %2108 = vmatpush1.bf16.msra.mxu0 %v1641
    %2109 = vmatprep.subr.bf16.mxu0 %v1646
    %2110 = vmatpush1.bf16.msra.mxu0 %v1645
    %2111 = vmatprep.subr.bf16.mxu0 %v1650
    %2112 = vmatpush1.bf16.msra.mxu0 %v1649
    %2113 = vmatprep.subr.bf16.mxu0 %v1654
    %2114 = vmatpush1.bf16.msra.mxu0 %v1653
    %2115 = vmatprep.subr.bf16.mxu0 %v1658
    %2116 = vmatpush1.bf16.msra.mxu0 %v1657
    %2117 = vmatprep.subr.bf16.mxu0 %v1662
    %2118 = vmatpush1.bf16.msra.mxu0 %v1661
    %2119 = vmatprep.subr.bf16.mxu0 %v1666
    %2120 = vmatpush1.bf16.msra.mxu0 %v1665
    %2121 = vmatprep.subr.bf16.mxu0 %v1670
    %2122 = vmatpush1.bf16.msra.mxu0 %v1669
    %2123 = vmatprep.subr.bf16.mxu0 %v1674
    %2124 = vmatpush1.bf16.msra.mxu0 %v1673
    %2125 = vmatprep.subr.bf16.mxu0 %v1678
    %2126 = vmatpush1.bf16.msra.mxu0 %v1677
    %2127 = vmatprep.subr.bf16.mxu0 %v1682
    %2128 = vmatpush1.bf16.msra.mxu0 %v1681
    %2129 = vmatprep.subr.bf16.mxu0 %v1686
    %2130 = vmatpush1.bf16.msra.mxu0 %v1685
    %2131 = vmatprep.subr.bf16.mxu0 %v1690
    %2132 = vmatpush1.bf16.msra.mxu0 %v1689
    %2133 = vmatprep.subr.bf16.mxu0 %v1694
    %2134 = vmatpush1.bf16.msra.mxu0 %v1693
    %2135 = vmatprep.subr.bf16.mxu0 %v1698
    %2136 = vmatpush1.bf16.msra.mxu0 %v1697
    %2137 = vmatprep.subr.bf16.mxu0 %v1702
    %2138 = vmatpush1.bf16.msra.mxu0 %v1701
    %2139 = vmatprep.mubr.bf16.mxu0 %v464
    %2140 = vmatmul.mubr.bf16.gmra.mrb[0].mxu0 %v463
    %v2141 = vpop.f32.mrb[0].mxu0
    %v2142 = vadd.f32 %v2101, %v2141
    %v2143 = vpop.f32.mrb[0].mxu0
    %v2144 = vadd.f32 %v2103, %v2143
    %v2145 = vpop.f32.mrb[0].mxu0
    %v2146 = vpop.f32.mrb[0].mxu0
    %2147 = vdwg.mxu0
    %2148 = vmatprep.subr.bf16.mxu0 %v1706
    %2149 = vmatpush1.bf16.msra.mxu0 %v1705
    %2150 = vmatprep.subr.bf16.mxu0 %v1710
    %2151 = vmatpush1.bf16.msra.mxu0 %v1709
    %2152 = vmatprep.subr.bf16.mxu0 %v1714
    %2153 = vmatpush1.bf16.msra.mxu0 %v1713
    %2154 = vmatprep.subr.bf16.mxu0 %v1718
    %2155 = vmatpush1.bf16.msra.mxu0 %v1717
    %2156 = vmatprep.subr.bf16.mxu0 %v1722
    %2157 = vmatpush1.bf16.msra.mxu0 %v1721
    %2158 = vmatprep.subr.bf16.mxu0 %v1726
    %2159 = vmatpush1.bf16.msra.mxu0 %v1725
    %2160 = vmatprep.subr.bf16.mxu0 %v1730
    %2161 = vmatpush1.bf16.msra.mxu0 %v1729
    %2162 = vmatprep.subr.bf16.mxu0 %v1734
    %2163 = vmatpush1.bf16.msra.mxu0 %v1733
    %2164 = vmatprep.subr.bf16.mxu0 %v1738
    %2165 = vmatpush1.bf16.msra.mxu0 %v1737
    %2166 = vmatprep.subr.bf16.mxu0 %v1742
    %2167 = vmatpush1.bf16.msra.mxu0 %v1741
    %2168 = vmatprep.subr.bf16.mxu0 %v1746
    %2169 = vmatpush1.bf16.msra.mxu0 %v1745
    %2170 = vmatprep.subr.bf16.mxu0 %v1750
    %2171 = vmatpush1.bf16.msra.mxu0 %v1749
    %2172 = vmatprep.subr.bf16.mxu0 %v1754
    %2173 = vmatpush1.bf16.msra.mxu0 %v1753
    %2174 = vmatprep.subr.bf16.mxu0 %v1758
    %2175 = vmatpush1.bf16.msra.mxu0 %v1757
    %2176 = vmatprep.subr.bf16.mxu0 %v1762
    %2177 = vmatpush1.bf16.msra.mxu0 %v1761
    %2178 = vmatprep.subr.bf16.mxu0 %v1766
    %2179 = vmatpush1.bf16.msra.mxu0 %v1765
    %2180 = vmatprep.mubr.bf16.mxu0 %v466
    %2181 = vmatmul.mubr.bf16.gmra.mrb[0].mxu0 %v465
    %v2182 = vpop.f32.mrb[0].mxu0
    %v2183 = vadd.f32 %v2142, %v2182
    %v2184 = vpop.f32.mrb[0].mxu0
    %v2185 = vadd.f32 %v2144, %v2184
    %v2186 = vpop.f32.mrb[0].mxu0
    %v2187 = vpop.f32.mrb[0].mxu0
    %2188 = vdwg.mxu0
    %2189 = vmatprep.subr.bf16.mxu0 %v1516
    %2190 = vmatpush1.bf16.msra.mxu0 %v1515
    %2191 = vmatprep.subr.bf16.mxu0 %v1520
    %2192 = vmatpush1.bf16.msra.mxu0 %v1519
    %2193 = vmatprep.subr.bf16.mxu0 %v1524
    %2194 = vmatpush1.bf16.msra.mxu0 %v1523
    %2195 = vmatprep.subr.bf16.mxu0 %v1528
    %2196 = vmatpush1.bf16.msra.mxu0 %v1527
    %2197 = vmatprep.subr.bf16.mxu0 %v1532
    %2198 = vmatpush1.bf16.msra.mxu0 %v1531
    %2199 = vmatprep.subr.bf16.mxu0 %v1536
    %2200 = vmatpush1.bf16.msra.mxu0 %v1535
    %2201 = vmatprep.subr.bf16.mxu0 %v1540
    %2202 = vmatpush1.bf16.msra.mxu0 %v1539
    %2203 = vmatprep.subr.bf16.mxu0 %v1544
    %2204 = vmatpush1.bf16.msra.mxu0 %v1543
    %2205 = vmatprep.subr.bf16.mxu0 %v1548
    %2206 = vmatpush1.bf16.msra.mxu0 %v1547
    %2207 = vmatprep.subr.bf16.mxu0 %v1552
    %2208 = vmatpush1.bf16.msra.mxu0 %v1551
    %2209 = vmatprep.subr.bf16.mxu0 %v1556
    %2210 = vmatpush1.bf16.msra.mxu0 %v1555
    %2211 = vmatprep.subr.bf16.mxu0 %v1560
    %2212 = vmatpush1.bf16.msra.mxu0 %v1559
    %2213 = vmatprep.subr.bf16.mxu0 %v1564
    %2214 = vmatpush1.bf16.msra.mxu0 %v1563
    %2215 = vmatprep.subr.bf16.mxu0 %v1568
    %2216 = vmatpush1.bf16.msra.mxu0 %v1567
    %2217 = vmatprep.subr.bf16.mxu0 %v1572
    %2218 = vmatpush1.bf16.msra.mxu0 %v1571
    %2219 = vmatprep.subr.bf16.mxu0 %v1576
    %2220 = vmatpush1.bf16.msra.mxu0 %v1575
    %2221 = vmatprep.mubr.bf16.mxu0 %v460
    %2222 = vmatmul.mubr.bf16.gmra.mrb[0].mxu0 %v459
    %v2223 = vpop.f32.mrb[0].mxu0
    %v2224 = vadd.f32 %v736, %v2223
    %v2225 = vpop.f32.mrb[0].mxu0
    %v2226 = vadd.f32 %v740, %v2225
    %v2227 = vpop.f32.mrb[0].mxu0
    %v2228 = vpop.f32.mrb[0].mxu0
    %2229 = vdwg.mxu0
    %2230 = vmatprep.subr.bf16.mxu0 %v1580
    %2231 = vmatpush1.bf16.msra.mxu0 %v1579
    %2232 = vmatprep.subr.bf16.mxu0 %v1584
    %2233 = vmatpush1.bf16.msra.mxu0 %v1583
    %2234 = vmatprep.subr.bf16.mxu0 %v1588
    %2235 = vmatpush1.bf16.msra.mxu0 %v1587
    %2236 = vmatprep.subr.bf16.mxu0 %v1592
    %2237 = vmatpush1.bf16.msra.mxu0 %v1591
    %2238 = vmatprep.subr.bf16.mxu0 %v1596
    %2239 = vmatpush1.bf16.msra.mxu0 %v1595
    %2240 = vmatprep.subr.bf16.mxu0 %v1600
    %2241 = vmatpush1.bf16.msra.mxu0 %v1599
    %2242 = vmatprep.subr.bf16.mxu0 %v1604
    %2243 = vmatpush1.bf16.msra.mxu0 %v1603
    %2244 = vmatprep.subr.bf16.mxu0 %v1608
    %2245 = vmatpush1.bf16.msra.mxu0 %v1607
    %2246 = vmatprep.subr.bf16.mxu0 %v1612
    %2247 = vmatpush1.bf16.msra.mxu0 %v1611
    %2248 = vmatprep.subr.bf16.mxu0 %v1616
    %2249 = vmatpush1.bf16.msra.mxu0 %v1615
    %2250 = vmatprep.subr.bf16.mxu0 %v1620
    %2251 = vmatpush1.bf16.msra.mxu0 %v1619
    %2252 = vmatprep.subr.bf16.mxu0 %v1624
    %2253 = vmatpush1.bf16.msra.mxu0 %v1623
    %2254 = vmatprep.subr.bf16.mxu0 %v1628
    %2255 = vmatpush1.bf16.msra.mxu0 %v1627
    %2256 = vmatprep.subr.bf16.mxu0 %v1632
    %2257 = vmatpush1.bf16.msra.mxu0 %v1631
    %2258 = vmatprep.subr.bf16.mxu0 %v1636
    %2259 = vmatpush1.bf16.msra.mxu0 %v1635
    %2260 = vmatprep.subr.bf16.mxu0 %v1640
    %2261 = vmatpush1.bf16.msra.mxu0 %v1639
    %2262 = vmatprep.mubr.bf16.mxu0 %v462
    %2263 = vmatmul.mubr.bf16.gmra.mrb[0].mxu0 %v461
    %v2264 = vpop.f32.mrb[0].mxu0
    %v2265 = vadd.f32 %v2224, %v2264
    %v2266 = vpop.f32.mrb[0].mxu0
    %v2267 = vadd.f32 %v2226, %v2266
    %v2268 = vpop.f32.mrb[0].mxu0
    %v2269 = vpop.f32.mrb[0].mxu0
    %2270 = vdwg.mxu0
    %2271 = vmatprep.subr.bf16.mxu0 %v1644
    %2272 = vmatpush1.bf16.msra.mxu0 %v1643
    %2273 = vmatprep.subr.bf16.mxu0 %v1648
    %2274 = vmatpush1.bf16.msra.mxu0 %v1647
    %2275 = vmatprep.subr.bf16.mxu0 %v1652
    %2276 = vmatpush1.bf16.msra.mxu0 %v1651
    %2277 = vmatprep.subr.bf16.mxu0 %v1656
    %2278 = vmatpush1.bf16.msra.mxu0 %v1655
    %2279 = vmatprep.subr.bf16.mxu0 %v1660
    %2280 = vmatpush1.bf16.msra.mxu0 %v1659
    %2281 = vmatprep.subr.bf16.mxu0 %v1664
    %2282 = vmatpush1.bf16.msra.mxu0 %v1663
    %2283 = vmatprep.subr.bf16.mxu0 %v1668
    %2284 = vmatpush1.bf16.msra.mxu0 %v1667
    %2285 = vmatprep.subr.bf16.mxu0 %v1672
    %2286 = vmatpush1.bf16.msra.mxu0 %v1671
    %2287 = vmatprep.subr.bf16.mxu0 %v1676
    %2288 = vmatpush1.bf16.msra.mxu0 %v1675
    %2289 = vmatprep.subr.bf16.mxu0 %v1680
    %2290 = vmatpush1.bf16.msra.mxu0 %v1679
    %2291 = vmatprep.subr.bf16.mxu0 %v1684
    %2292 = vmatpush1.bf16.msra.mxu0 %v1683
    %2293 = vmatprep.subr.bf16.mxu0 %v1688
    %2294 = vmatpush1.bf16.msra.mxu0 %v1687
    %2295 = vmatprep.subr.bf16.mxu0 %v1692
    %2296 = vmatpush1.bf16.msra.mxu0 %v1691
    %2297 = vmatprep.subr.bf16.mxu0 %v1696
    %2298 = vmatpush1.bf16.msra.mxu0 %v1695
    %2299 = vmatprep.subr.bf16.mxu0 %v1700
    %2300 = vmatpush1.bf16.msra.mxu0 %v1699
    %2301 = vmatprep.subr.bf16.mxu0 %v1704
    %2302 = vmatpush1.bf16.msra.mxu0 %v1703
    %2303 = vmatprep.mubr.bf16.mxu0 %v464
    %2304 = vmatmul.mubr.bf16.gmra.mrb[0].mxu0 %v463
    %v2305 = vpop.f32.mrb[0].mxu0
    %v2306 = vadd.f32 %v2265, %v2305
    %v2307 = vpop.f32.mrb[0].mxu0
    %v2308 = vadd.f32 %v2267, %v2307
    %v2309 = vpop.f32.mrb[0].mxu0
    %v2310 = vpop.f32.mrb[0].mxu0
    %2311 = vdwg.mxu0
    %2312 = vmatprep.subr.bf16.mxu0 %v1708
    %2313 = vmatpush1.bf16.msra.mxu0 %v1707
    %2314 = vmatprep.subr.bf16.mxu0 %v1712
    %2315 = vmatpush1.bf16.msra.mxu0 %v1711
    %2316 = vmatprep.subr.bf16.mxu0 %v1716
    %2317 = vmatpush1.bf16.msra.mxu0 %v1715
    %2318 = vmatprep.subr.bf16.mxu0 %v1720
    %2319 = vmatpush1.bf16.msra.mxu0 %v1719
    %2320 = vmatprep.subr.bf16.mxu0 %v1724
    %2321 = vmatpush1.bf16.msra.mxu0 %v1723
    %2322 = vmatprep.subr.bf16.mxu0 %v1728
    %2323 = vmatpush1.bf16.msra.mxu0 %v1727
    %2324 = vmatprep.subr.bf16.mxu0 %v1732
    %2325 = vmatpush1.bf16.msra.mxu0 %v1731
    %2326 = vmatprep.subr.bf16.mxu0 %v1736
    %2327 = vmatpush1.bf16.msra.mxu0 %v1735
    %2328 = vmatprep.subr.bf16.mxu0 %v1740
    %2329 = vmatpush1.bf16.msra.mxu0 %v1739
    %2330 = vmatprep.subr.bf16.mxu0 %v1744
    %2331 = vmatpush1.bf16.msra.mxu0 %v1743
    %2332 = vmatprep.subr.bf16.mxu0 %v1748
    %2333 = vmatpush1.bf16.msra.mxu0 %v1747
    %2334 = vmatprep.subr.bf16.mxu0 %v1752
    %2335 = vmatpush1.bf16.msra.mxu0 %v1751
    %2336 = vmatprep.subr.bf16.mxu0 %v1756
    %2337 = vmatpush1.bf16.msra.mxu0 %v1755
    %2338 = vmatprep.subr.bf16.mxu0 %v1760
    %2339 = vmatpush1.bf16.msra.mxu0 %v1759
    %2340 = vmatprep.subr.bf16.mxu0 %v1764
    %2341 = vmatpush1.bf16.msra.mxu0 %v1763
    %2342 = vmatprep.subr.bf16.mxu0 %v1768
    %2343 = vmatpush1.bf16.msra.mxu0 %v1767
    %2344 = vmatprep.mubr.bf16.mxu0 %v466
    %2345 = vmatmul.mubr.bf16.gmra.mrb[0].mxu0 %v465
    %v2346 = vpop.f32.mrb[0].mxu0
    %v2347 = vadd.f32 %v2306, %v2346
    %v2348 = vpop.f32.mrb[0].mxu0
    %v2349 = vadd.f32 %v2308, %v2348
    %v2350 = vpop.f32.mrb[0].mxu0
    %v2351 = vpop.f32.mrb[0].mxu0
    %2352 = vdwg.mxu0
    %v2353 = vsub.f32 0.0, %v2183
    %v2354 = vsub.f32 0.0, %v2185
    %v2355 = vsub.f32 0.0, %v2347
    %v2356 = vsub.f32 0.0, %v2349
    %v2357 = vmul.f32 %v2353, 1.442695
    %v2358 = vpow.pop %v2357
    %v2359 = vmul.f32 %v2354, 1.442695
    %v2360 = vpow.pop %v2359
    %v2361 = vmul.f32 %v2355, 1.442695
    %v2362 = vpow.pop %v2361
    %v2363 = vmul.f32 %v2356, 1.442695
    %v2364 = vpow.pop %v2363
    %v2365 = vadd.f32 %v2358, 1.0
    %v2366 = vadd.f32 %v2360, 1.0
    %v2367 = vadd.f32 %v2362, 1.0
    %v2368 = vadd.f32 %v2364, 1.0
    %v2369 = vrcp.pop %v2365
    %v2370 = vrcp.pop %v2366
    %v2371 = vrcp.pop %v2367
    %v2372 = vrcp.pop %v2368
    %v2373 = vpack.c.bf16 %v2369, %v2369
    %v2374 = vpack.c.bf16 %v2370, %v2370
    %v2375 = vpack.c.bf16 %v2371, %v2371
    %v2376 = vpack.c.bf16 %v2372, %v2372
    %v2377 = vld [vmem:[#allocation10] sm:$0xff]
    %v2378 = vld [vmem:[#allocation10 + $0x8] sm:$0xff]
    %v2379 = vld [vmem:[#allocation10 + $0x10] sm:$0xff]
    %v2380 = vld [vmem:[#allocation10 + $0x18] sm:$0xff]
    %v2381 = vld [vmem:[#allocation10 + $0x20] sm:$0xff]
    %v2382 = vld [vmem:[#allocation10 + $0x28] sm:$0xff]
    %v2383 = vld [vmem:[#allocation10 + $0x30] sm:$0xff]
    %v2384 = vld [vmem:[#allocation10 + $0x38] sm:$0xff]
    %v2385 = vld [vmem:[#allocation10 + $0x40] sm:$0xff]
    %v2386 = vld [vmem:[#allocation10 + $0x48] sm:$0xff]
    %v2387 = vld [vmem:[#allocation10 + $0x50] sm:$0xff]
    %v2388 = vld [vmem:[#allocation10 + $0x58] sm:$0xff]
    %v2389 = vld [vmem:[#allocation10 + $0x60] sm:$0xff]
    %v2390 = vld [vmem:[#allocation10 + $0x68] sm:$0xff]
    %v2391 = vld [vmem:[#allocation10 + $0x70] sm:$0xff]
    %v2392 = vld [vmem:[#allocation10 + $0x78] sm:$0xff]
    %v2393 = vld [vmem:[#allocation10 + $0x80] sm:$0xff]
    %v2394 = vld [vmem:[#allocation10 + $0x88] sm:$0xff]
    %v2395 = vld [vmem:[#allocation10 + $0x90] sm:$0xff]
    %v2396 = vld [vmem:[#allocation10 + $0x98] sm:$0xff]
    %v2397 = vld [vmem:[#allocation10 + $0xa0] sm:$0xff]
    %v2398 = vld [vmem:[#allocation10 + $0xa8] sm:$0xff]
    %v2399 = vld [vmem:[#allocation10 + $0xb0] sm:$0xff]
    %v2400 = vld [vmem:[#allocation10 + $0xb8] sm:$0xff]
    %v2401 = vld [vmem:[#allocation10 + $0xc0] sm:$0xff]
    %v2402 = vld [vmem:[#allocation10 + $0xc8] sm:$0xff]
    %v2403 = vld [vmem:[#allocation10 + $0xd0] sm:$0xff]
    %v2404 = vld [vmem:[#allocation10 + $0xd8] sm:$0xff]
    %v2405 = vld [vmem:[#allocation10 + $0xe0] sm:$0xff]
    %v2406 = vld [vmem:[#allocation10 + $0xe8] sm:$0xff]
    %v2407 = vld [vmem:[#allocation10 + $0xf0] sm:$0xff]
    %v2408 = vld [vmem:[#allocation10 + $0xf8] sm:$0xff]
    %v2409 = vld [vmem:[#allocation10 + $0x100] sm:$0xff]
    %v2410 = vld [vmem:[#allocation10 + $0x108] sm:$0xff]
    %v2411 = vld [vmem:[#allocation10 + $0x110] sm:$0xff]
    %v2412 = vld [vmem:[#allocation10 + $0x118] sm:$0xff]
    %v2413 = vld [vmem:[#allocation10 + $0x120] sm:$0xff]
    %v2414 = vld [vmem:[#allocation10 + $0x128] sm:$0xff]
    %v2415 = vld [vmem:[#allocation10 + $0x130] sm:$0xff]
    %v2416 = vld [vmem:[#allocation10 + $0x138] sm:$0xff]
    %v2417 = vld [vmem:[#allocation10 + $0x140] sm:$0xff]
    %v2418 = vld [vmem:[#allocation10 + $0x148] sm:$0xff]
    %v2419 = vld [vmem:[#allocation10 + $0x150] sm:$0xff]
    %v2420 = vld [vmem:[#allocation10 + $0x158] sm:$0xff]
    %v2421 = vld [vmem:[#allocation10 + $0x160] sm:$0xff]
    %v2422 = vld [vmem:[#allocation10 + $0x168] sm:$0xff]
    %v2423 = vld [vmem:[#allocation10 + $0x170] sm:$0xff]
    %v2424 = vld [vmem:[#allocation10 + $0x178] sm:$0xff]
    %v2425 = vld [vmem:[#allocation10 + $0x180] sm:$0xff]
    %v2426 = vld [vmem:[#allocation10 + $0x188] sm:$0xff]
    %v2427 = vld [vmem:[#allocation10 + $0x190] sm:$0xff]
    %v2428 = vld [vmem:[#allocation10 + $0x198] sm:$0xff]
    %v2429 = vld [vmem:[#allocation10 + $0x1a0] sm:$0xff]
    %v2430 = vld [vmem:[#allocation10 + $0x1a8] sm:$0xff]
    %v2431 = vld [vmem:[#allocation10 + $0x1b0] sm:$0xff]
    %v2432 = vld [vmem:[#allocation10 + $0x1b8] sm:$0xff]
    %v2433 = vld [vmem:[#allocation10 + $0x1c0] sm:$0xff]
    %v2434 = vld [vmem:[#allocation10 + $0x1c8] sm:$0xff]
    %v2435 = vld [vmem:[#allocation10 + $0x1d0] sm:$0xff]
    %v2436 = vld [vmem:[#allocation10 + $0x1d8] sm:$0xff]
    %v2437 = vld [vmem:[#allocation10 + $0x1e0] sm:$0xff]
    %v2438 = vld [vmem:[#allocation10 + $0x1e8] sm:$0xff]
    %v2439 = vld [vmem:[#allocation10 + $0x1f0] sm:$0xff]
    %v2440 = vld [vmem:[#allocation10 + $0x1f8] sm:$0xff]
    %v2441 = vld [vmem:[%s6] sm:$0x3]
    %v2443 = vlaneseq
    %v2444 = vshrl.u32 %v2443, 7
    %v2445 = vsub.s32 0, %v2444
    %v2446 = vrot.slane %v2441, %v2445
    %v2447 = vlaneseq
    %v2448 = vshrl.u32 %v2447, 7
    %v2449 = vsub.s32 1, %v2448
    %v2450 = vrot.slane %v2441, %v2449
    %v2517 = vunpack.c.l.b16 %v2377
    %v2518 = vunpack.c.h.b16 %v2377
    %v2519 = vunpack.c.l.b16 %v2378
    %v2520 = vunpack.c.h.b16 %v2378
    %v2521 = vunpack.c.l.b16 %v2379
    %v2522 = vunpack.c.h.b16 %v2379
    %v2523 = vunpack.c.l.b16 %v2380
    %v2524 = vunpack.c.h.b16 %v2380
    %v2525 = vunpack.c.l.b16 %v2381
    %v2526 = vunpack.c.h.b16 %v2381
    %v2527 = vunpack.c.l.b16 %v2382
    %v2528 = vunpack.c.h.b16 %v2382
    %v2529 = vunpack.c.l.b16 %v2383
    %v2530 = vunpack.c.h.b16 %v2383
    %v2531 = vunpack.c.l.b16 %v2384
    %v2532 = vunpack.c.h.b16 %v2384
    %v2533 = vunpack.c.l.b16 %v2385
    %v2534 = vunpack.c.h.b16 %v2385
    %v2535 = vunpack.c.l.b16 %v2386
    %v2536 = vunpack.c.h.b16 %v2386
    %v2537 = vunpack.c.l.b16 %v2387
    %v2538 = vunpack.c.h.b16 %v2387
    %v2539 = vunpack.c.l.b16 %v2388
    %v2540 = vunpack.c.h.b16 %v2388
    %v2541 = vunpack.c.l.b16 %v2389
    %v2542 = vunpack.c.h.b16 %v2389
    %v2543 = vunpack.c.l.b16 %v2390
    %v2544 = vunpack.c.h.b16 %v2390
    %v2545 = vunpack.c.l.b16 %v2391
    %v2546 = vunpack.c.h.b16 %v2391
    %v2547 = vunpack.c.l.b16 %v2392
    %v2548 = vunpack.c.h.b16 %v2392
    %v2549 = vunpack.c.l.b16 %v2393
    %v2550 = vunpack.c.h.b16 %v2393
    %v2551 = vunpack.c.l.b16 %v2394
    %v2552 = vunpack.c.h.b16 %v2394
    %v2553 = vunpack.c.l.b16 %v2395
    %v2554 = vunpack.c.h.b16 %v2395
    %v2555 = vunpack.c.l.b16 %v2396
    %v2556 = vunpack.c.h.b16 %v2396
    %v2557 = vunpack.c.l.b16 %v2397
    %v2558 = vunpack.c.h.b16 %v2397
    %v2559 = vunpack.c.l.b16 %v2398
    %v2560 = vunpack.c.h.b16 %v2398
    %v2561 = vunpack.c.l.b16 %v2399
    %v2562 = vunpack.c.h.b16 %v2399
    %v2563 = vunpack.c.l.b16 %v2400
    %v2564 = vunpack.c.h.b16 %v2400
    %v2565 = vunpack.c.l.b16 %v2401
    %v2566 = vunpack.c.h.b16 %v2401
    %v2567 = vunpack.c.l.b16 %v2402
    %v2568 = vunpack.c.h.b16 %v2402
    %v2569 = vunpack.c.l.b16 %v2403
    %v2570 = vunpack.c.h.b16 %v2403
    %v2571 = vunpack.c.l.b16 %v2404
    %v2572 = vunpack.c.h.b16 %v2404
    %v2573 = vunpack.c.l.b16 %v2405
    %v2574 = vunpack.c.h.b16 %v2405
    %v2575 = vunpack.c.l.b16 %v2406
    %v2576 = vunpack.c.h.b16 %v2406
    %v2577 = vunpack.c.l.b16 %v2407
    %v2578 = vunpack.c.h.b16 %v2407
    %v2579 = vunpack.c.l.b16 %v2408
    %v2580 = vunpack.c.h.b16 %v2408
    %v2581 = vunpack.c.l.b16 %v2409
    %v2582 = vunpack.c.h.b16 %v2409
    %v2583 = vunpack.c.l.b16 %v2410
    %v2584 = vunpack.c.h.b16 %v2410
    %v2585 = vunpack.c.l.b16 %v2411
    %v2586 = vunpack.c.h.b16 %v2411
    %v2587 = vunpack.c.l.b16 %v2412
    %v2588 = vunpack.c.h.b16 %v2412
    %v2589 = vunpack.c.l.b16 %v2413
    %v2590 = vunpack.c.h.b16 %v2413
    %v2591 = vunpack.c.l.b16 %v2414
    %v2592 = vunpack.c.h.b16 %v2414
    %v2593 = vunpack.c.l.b16 %v2415
    %v2594 = vunpack.c.h.b16 %v2415
    %v2595 = vunpack.c.l.b16 %v2416
    %v2596 = vunpack.c.h.b16 %v2416
    %v2597 = vunpack.c.l.b16 %v2417
    %v2598 = vunpack.c.h.b16 %v2417
    %v2599 = vunpack.c.l.b16 %v2418
    %v2600 = vunpack.c.h.b16 %v2418
    %v2601 = vunpack.c.l.b16 %v2419
    %v2602 = vunpack.c.h.b16 %v2419
    %v2603 = vunpack.c.l.b16 %v2420
    %v2604 = vunpack.c.h.b16 %v2420
    %v2605 = vunpack.c.l.b16 %v2421
    %v2606 = vunpack.c.h.b16 %v2421
    %v2607 = vunpack.c.l.b16 %v2422
    %v2608 = vunpack.c.h.b16 %v2422
    %v2609 = vunpack.c.l.b16 %v2423
    %v2610 = vunpack.c.h.b16 %v2423
    %v2611 = vunpack.c.l.b16 %v2424
    %v2612 = vunpack.c.h.b16 %v2424
    %v2613 = vunpack.c.l.b16 %v2425
    %v2614 = vunpack.c.h.b16 %v2425
    %v2615 = vunpack.c.l.b16 %v2426
    %v2616 = vunpack.c.h.b16 %v2426
    %v2617 = vunpack.c.l.b16 %v2427
    %v2618 = vunpack.c.h.b16 %v2427
    %v2619 = vunpack.c.l.b16 %v2428
    %v2620 = vunpack.c.h.b16 %v2428
    %v2621 = vunpack.c.l.b16 %v2429
    %v2622 = vunpack.c.h.b16 %v2429
    %v2623 = vunpack.c.l.b16 %v2430
    %v2624 = vunpack.c.h.b16 %v2430
    %v2625 = vunpack.c.l.b16 %v2431
    %v2626 = vunpack.c.h.b16 %v2431
    %v2627 = vunpack.c.l.b16 %v2432
    %v2628 = vunpack.c.h.b16 %v2432
    %v2629 = vunpack.c.l.b16 %v2433
    %v2630 = vunpack.c.h.b16 %v2433
    %v2631 = vunpack.c.l.b16 %v2434
    %v2632 = vunpack.c.h.b16 %v2434
    %v2633 = vunpack.c.l.b16 %v2435
    %v2634 = vunpack.c.h.b16 %v2435
    %v2635 = vunpack.c.l.b16 %v2436
    %v2636 = vunpack.c.h.b16 %v2436
    %v2637 = vunpack.c.l.b16 %v2437
    %v2638 = vunpack.c.h.b16 %v2437
    %v2639 = vunpack.c.l.b16 %v2438
    %v2640 = vunpack.c.h.b16 %v2438
    %v2641 = vunpack.c.l.b16 %v2439
    %v2642 = vunpack.c.h.b16 %v2439
    %v2643 = vunpack.c.l.b16 %v2440
    %v2644 = vunpack.c.h.b16 %v2440
    %v2645 = vpack.c.b16 %v2519, %v2517
    %v2646 = vpack.c.b16 %v2520, %v2518
    %v2647 = vpack.c.b16 %v2523, %v2521
    %v2648 = vpack.c.b16 %v2524, %v2522
    %v2649 = vpack.c.b16 %v2527, %v2525
    %v2650 = vpack.c.b16 %v2528, %v2526
    %v2651 = vpack.c.b16 %v2531, %v2529
    %v2652 = vpack.c.b16 %v2532, %v2530
    %v2653 = vpack.c.b16 %v2535, %v2533
    %v2654 = vpack.c.b16 %v2536, %v2534
    %v2655 = vpack.c.b16 %v2539, %v2537
    %v2656 = vpack.c.b16 %v2540, %v2538
    %v2657 = vpack.c.b16 %v2543, %v2541
    %v2658 = vpack.c.b16 %v2544, %v2542
    %v2659 = vpack.c.b16 %v2547, %v2545
    %v2660 = vpack.c.b16 %v2548, %v2546
    %v2661 = vpack.c.b16 %v2551, %v2549
    %v2662 = vpack.c.b16 %v2552, %v2550
    %v2663 = vpack.c.b16 %v2555, %v2553
    %v2664 = vpack.c.b16 %v2556, %v2554
    %v2665 = vpack.c.b16 %v2559, %v2557
    %v2666 = vpack.c.b16 %v2560, %v2558
    %v2667 = vpack.c.b16 %v2563, %v2561
    %v2668 = vpack.c.b16 %v2564, %v2562
    %v2669 = vpack.c.b16 %v2567, %v2565
    %v2670 = vpack.c.b16 %v2568, %v2566
    %v2671 = vpack.c.b16 %v2571, %v2569
    %v2672 = vpack.c.b16 %v2572, %v2570
    %v2673 = vpack.c.b16 %v2575, %v2573
    %v2674 = vpack.c.b16 %v2576, %v2574
    %v2675 = vpack.c.b16 %v2579, %v2577
    %v2676 = vpack.c.b16 %v2580, %v2578
    %v2677 = vpack.c.b16 %v2583, %v2581
    %v2678 = vpack.c.b16 %v2584, %v2582
    %v2679 = vpack.c.b16 %v2587, %v2585
    %v2680 = vpack.c.b16 %v2588, %v2586
    %v2681 = vpack.c.b16 %v2591, %v2589
    %v2682 = vpack.c.b16 %v2592, %v2590
    %v2683 = vpack.c.b16 %v2595, %v2593
    %v2684 = vpack.c.b16 %v2596, %v2594
    %v2685 = vpack.c.b16 %v2599, %v2597
    %v2686 = vpack.c.b16 %v2600, %v2598
    %v2687 = vpack.c.b16 %v2603, %v2601
    %v2688 = vpack.c.b16 %v2604, %v2602
    %v2689 = vpack.c.b16 %v2607, %v2605
    %v2690 = vpack.c.b16 %v2608, %v2606
    %v2691 = vpack.c.b16 %v2611, %v2609
    %v2692 = vpack.c.b16 %v2612, %v2610
    %v2693 = vpack.c.b16 %v2615, %v2613
    %v2694 = vpack.c.b16 %v2616, %v2614
    %v2695 = vpack.c.b16 %v2619, %v2617
    %v2696 = vpack.c.b16 %v2620, %v2618
    %v2697 = vpack.c.b16 %v2623, %v2621
    %v2698 = vpack.c.b16 %v2624, %v2622
    %v2699 = vpack.c.b16 %v2627, %v2625
    %v2700 = vpack.c.b16 %v2628, %v2626
    %v2701 = vpack.c.b16 %v2631, %v2629
    %v2702 = vpack.c.b16 %v2632, %v2630
    %v2703 = vpack.c.b16 %v2635, %v2633
    %v2704 = vpack.c.b16 %v2636, %v2634
    %v2705 = vpack.c.b16 %v2639, %v2637
    %v2706 = vpack.c.b16 %v2640, %v2638
    %v2707 = vpack.c.b16 %v2643, %v2641
    %v2708 = vpack.c.b16 %v2644, %v2642
    %2773 = vmatprep.subr.bf16.mxu0 %v2646
    %2774 = vmatpush1.bf16.msra.mxu0 %v2645
    %2775 = vmatprep.subr.bf16.mxu0 %v2648
    %2776 = vmatpush1.bf16.msra.mxu0 %v2647
    %2777 = vmatprep.subr.bf16.mxu0 %v2650
    %2778 = vmatpush1.bf16.msra.mxu0 %v2649
    %2779 = vmatprep.subr.bf16.mxu0 %v2652
    %2780 = vmatpush1.bf16.msra.mxu0 %v2651
    %2781 = vmatprep.subr.bf16.mxu0 %v2654
    %2782 = vmatpush1.bf16.msra.mxu0 %v2653
    %2783 = vmatprep.subr.bf16.mxu0 %v2656
    %2784 = vmatpush1.bf16.msra.mxu0 %v2655
    %2785 = vmatprep.subr.bf16.mxu0 %v2658
    %2786 = vmatpush1.bf16.msra.mxu0 %v2657
    %2787 = vmatprep.subr.bf16.mxu0 %v2660
    %2788 = vmatpush1.bf16.msra.mxu0 %v2659
    %2789 = vmatprep.subr.bf16.mxu0 %v2662
    %2790 = vmatpush1.bf16.msra.mxu0 %v2661
    %2791 = vmatprep.subr.bf16.mxu0 %v2664
    %2792 = vmatpush1.bf16.msra.mxu0 %v2663
    %2793 = vmatprep.subr.bf16.mxu0 %v2666
    %2794 = vmatpush1.bf16.msra.mxu0 %v2665
    %2795 = vmatprep.subr.bf16.mxu0 %v2668
    %2796 = vmatpush1.bf16.msra.mxu0 %v2667
    %2797 = vmatprep.subr.bf16.mxu0 %v2670
    %2798 = vmatpush1.bf16.msra.mxu0 %v2669
    %2799 = vmatprep.subr.bf16.mxu0 %v2672
    %2800 = vmatpush1.bf16.msra.mxu0 %v2671
    %2801 = vmatprep.subr.bf16.mxu0 %v2674
    %2802 = vmatpush1.bf16.msra.mxu0 %v2673
    %2803 = vmatprep.subr.bf16.mxu0 %v2676
    %2804 = vmatpush1.bf16.msra.mxu0 %v2675
    %2805 = vmatprep.mubr.bf16.mxu0 %v2374
    %2806 = vmatmul.mubr.bf16.gmra.mrb[0].mxu0 %v2373
    %v2807 = vpop.f32.mrb[0].mxu0
    %v2808 = vadd.f32 %v2446, %v2807
    %v2809 = vpop.f32.mrb[0].mxu0
    %v2810 = vadd.f32 %v2450, %v2809
    %v2811 = vpop.f32.mrb[0].mxu0
    %v2812 = vpop.f32.mrb[0].mxu0
    %2813 = vdwg.mxu0
    %2814 = vmatprep.subr.bf16.mxu0 %v2678
    %2815 = vmatpush1.bf16.msra.mxu0 %v2677
    %2816 = vmatprep.subr.bf16.mxu0 %v2680
    %2817 = vmatpush1.bf16.msra.mxu0 %v2679
    %2818 = vmatprep.subr.bf16.mxu0 %v2682
    %2819 = vmatpush1.bf16.msra.mxu0 %v2681
    %2820 = vmatprep.subr.bf16.mxu0 %v2684
    %2821 = vmatpush1.bf16.msra.mxu0 %v2683
    %2822 = vmatprep.subr.bf16.mxu0 %v2686
    %2823 = vmatpush1.bf16.msra.mxu0 %v2685
    %2824 = vmatprep.subr.bf16.mxu0 %v2688
    %2825 = vmatpush1.bf16.msra.mxu0 %v2687
    %2826 = vmatprep.subr.bf16.mxu0 %v2690
    %2827 = vmatpush1.bf16.msra.mxu0 %v2689
    %2828 = vmatprep.subr.bf16.mxu0 %v2692
    %2829 = vmatpush1.bf16.msra.mxu0 %v2691
    %2830 = vmatprep.subr.bf16.mxu0 %v2694
    %2831 = vmatpush1.bf16.msra.mxu0 %v2693
    %2832 = vmatprep.subr.bf16.mxu0 %v2696
    %2833 = vmatpush1.bf16.msra.mxu0 %v2695
    %2834 = vmatprep.subr.bf16.mxu0 %v2698
    %2835 = vmatpush1.bf16.msra.mxu0 %v2697
    %2836 = vmatprep.subr.bf16.mxu0 %v2700
    %2837 = vmatpush1.bf16.msra.mxu0 %v2699
    %2838 = vmatprep.subr.bf16.mxu0 %v2702
    %2839 = vmatpush1.bf16.msra.mxu0 %v2701
    %2840 = vmatprep.subr.bf16.mxu0 %v2704
    %2841 = vmatpush1.bf16.msra.mxu0 %v2703
    %2842 = vmatprep.subr.bf16.mxu0 %v2706
    %2843 = vmatpush1.bf16.msra.mxu0 %v2705
    %2844 = vmatprep.subr.bf16.mxu0 %v2708
    %2845 = vmatpush1.bf16.msra.mxu0 %v2707
    %2846 = vmatprep.mubr.bf16.mxu0 %v2376
    %2847 = vmatmul.mubr.bf16.gmra.mrb[0].mxu0 %v2375
    %v2848 = vpop.f32.mrb[0].mxu0
    %v2849 = vadd.f32 %v2808, %v2848
    %v2850 = vpop.f32.mrb[0].mxu0
    %v2851 = vadd.f32 %v2810, %v2850
    %v2852 = vpop.f32.mrb[0].mxu0
    %v2853 = vpop.f32.mrb[0].mxu0
    %2854 = vdwg.mxu0
    %v2855 = vsub.f32 0.0, %v2849
    %v2856 = vsub.f32 0.0, %v2851
    %v2857 = vmul.f32 %v2855, 1.442695
    %v2858 = vpow.pop %v2857
    %v2859 = vmul.f32 %v2856, 1.442695
    %v2860 = vpow.pop %v2859
    %v2861 = vadd.f32 %v2858, 1.0
    %v2862 = vadd.f32 %v2860, 1.0
    %v2863 = vrcp.pop %v2861
    %v2864 = vrcp.pop %v2862
    %v2865 = vpack.c.bf16 %v2863, %v2863
    %v2866 = vpack.c.bf16 %v2864, %v2864
    %v2867 = vld [vmem:[#allocation11] sm:$0xf]
    %v2868 = vld [vmem:[#allocation11 + $0x4] sm:$0xf]
    %v2869 = vld [vmem:[#allocation11 + $0x8] sm:$0xf]
    %v2870 = vld [vmem:[#allocation11 + $0xc] sm:$0xf]
    %v2871 = vld [vmem:[#allocation11 + $0x10] sm:$0xf]
    %v2872 = vld [vmem:[#allocation11 + $0x14] sm:$0xf]
    %v2873 = vld [vmem:[#allocation11 + $0x18] sm:$0xf]
    %v2874 = vld [vmem:[#allocation11 + $0x1c] sm:$0xf]
    %v2875 = vld [vmem:[#allocation11 + $0x20] sm:$0xf]
    %v2876 = vld [vmem:[#allocation11 + $0x24] sm:$0xf]
    %v2877 = vld [vmem:[#allocation11 + $0x28] sm:$0xf]
    %v2878 = vld [vmem:[#allocation11 + $0x2c] sm:$0xf]
    %v2879 = vld [vmem:[#allocation11 + $0x30] sm:$0xf]
    %v2880 = vld [vmem:[#allocation11 + $0x34] sm:$0xf]
    %v2881 = vld [vmem:[#allocation11 + $0x38] sm:$0xf]
    %v2882 = vld [vmem:[#allocation11 + $0x3c] sm:$0xf]
    %v2883 = vld [vmem:[#allocation11 + $0x40] sm:$0xf]
    %v2884 = vld [vmem:[#allocation11 + $0x44] sm:$0xf]
    %v2885 = vld [vmem:[#allocation11 + $0x48] sm:$0xf]
    %v2886 = vld [vmem:[#allocation11 + $0x4c] sm:$0xf]
    %v2887 = vld [vmem:[#allocation11 + $0x50] sm:$0xf]
    %v2888 = vld [vmem:[#allocation11 + $0x54] sm:$0xf]
    %v2889 = vld [vmem:[#allocation11 + $0x58] sm:$0xf]
    %v2890 = vld [vmem:[#allocation11 + $0x5c] sm:$0xf]
    %v2891 = vld [vmem:[#allocation11 + $0x60] sm:$0xf]
    %v2892 = vld [vmem:[#allocation11 + $0x64] sm:$0xf]
    %v2893 = vld [vmem:[#allocation11 + $0x68] sm:$0xf]
    %v2894 = vld [vmem:[#allocation11 + $0x6c] sm:$0xf]
    %v2895 = vld [vmem:[#allocation11 + $0x70] sm:$0xf]
    %v2896 = vld [vmem:[#allocation11 + $0x74] sm:$0xf]
    %v2897 = vld [vmem:[#allocation11 + $0x78] sm:$0xf]
    %v2898 = vld [vmem:[#allocation11 + $0x7c] sm:$0xf]
    %v2899 = vld [vmem:[%s8] sm:$0x1]
    %v2901 = vlaneseq
    %v2902 = vshrl.u32 %v2901, 7
    %v2903 = vsub.s32 0, %v2902
    %v2904 = vrot.slane %v2899, %v2903
    %v2938 = vunpack.c.l.b16 %v2867
    %v2939 = vunpack.c.l.b16 %v2868
    %v2940 = vunpack.c.l.b16 %v2869
    %v2941 = vunpack.c.l.b16 %v2870
    %v2942 = vunpack.c.l.b16 %v2871
    %v2943 = vunpack.c.l.b16 %v2872
    %v2944 = vunpack.c.l.b16 %v2873
    %v2945 = vunpack.c.l.b16 %v2874
    %v2946 = vunpack.c.l.b16 %v2875
    %v2947 = vunpack.c.l.b16 %v2876
    %v2948 = vunpack.c.l.b16 %v2877
    %v2949 = vunpack.c.l.b16 %v2878
    %v2950 = vunpack.c.l.b16 %v2879
    %v2951 = vunpack.c.l.b16 %v2880
    %v2952 = vunpack.c.l.b16 %v2881
    %v2953 = vunpack.c.l.b16 %v2882
    %v2954 = vunpack.c.l.b16 %v2883
    %v2955 = vunpack.c.l.b16 %v2884
    %v2956 = vunpack.c.l.b16 %v2885
    %v2957 = vunpack.c.l.b16 %v2886
    %v2958 = vunpack.c.l.b16 %v2887
    %v2959 = vunpack.c.l.b16 %v2888
    %v2960 = vunpack.c.l.b16 %v2889
    %v2961 = vunpack.c.l.b16 %v2890
    %v2962 = vunpack.c.l.b16 %v2891
    %v2963 = vunpack.c.l.b16 %v2892
    %v2964 = vunpack.c.l.b16 %v2893
    %v2965 = vunpack.c.l.b16 %v2894
    %v2966 = vunpack.c.l.b16 %v2895
    %v2967 = vunpack.c.l.b16 %v2896
    %v2968 = vunpack.c.l.b16 %v2897
    %v2969 = vunpack.c.l.b16 %v2898
    %v2970 = vpack.c.b16 %v2939, %v2938
    %v2971 = vpack.c.b16 %v2941, %v2940
    %v2972 = vpack.c.b16 %v2943, %v2942
    %v2973 = vpack.c.b16 %v2945, %v2944
    %v2974 = vpack.c.b16 %v2947, %v2946
    %v2975 = vpack.c.b16 %v2949, %v2948
    %v2976 = vpack.c.b16 %v2951, %v2950
    %v2977 = vpack.c.b16 %v2953, %v2952
    %v2978 = vpack.c.b16 %v2955, %v2954
    %v2979 = vpack.c.b16 %v2957, %v2956
    %v2980 = vpack.c.b16 %v2959, %v2958
    %v2981 = vpack.c.b16 %v2961, %v2960
    %v2982 = vpack.c.b16 %v2963, %v2962
    %v2983 = vpack.c.b16 %v2965, %v2964
    %v2984 = vpack.c.b16 %v2967, %v2966
    %v2985 = vpack.c.b16 %v2969, %v2968
    %3002 = vmatprep.subr.bf16.mxu0 0
    %3003 = vmatpush1.bf16.msra.mxu0 %v2970
    %3004 = vmatprep.subr.bf16.mxu0 0
    %3005 = vmatpush1.bf16.msra.mxu0 %v2971
    %3006 = vmatprep.subr.bf16.mxu0 0
    %3007 = vmatpush1.bf16.msra.mxu0 %v2972
    %3008 = vmatprep.subr.bf16.mxu0 0
    %3009 = vmatpush1.bf16.msra.mxu0 %v2973
    %3010 = vmatprep.subr.bf16.mxu0 0
    %3011 = vmatpush1.bf16.msra.mxu0 %v2974
    %3012 = vmatprep.subr.bf16.mxu0 0
    %3013 = vmatpush1.bf16.msra.mxu0 %v2975
    %3014 = vmatprep.subr.bf16.mxu0 0
    %3015 = vmatpush1.bf16.msra.mxu0 %v2976
    %3016 = vmatprep.subr.bf16.mxu0 0
    %3017 = vmatpush1.bf16.msra.mxu0 %v2977
    %3018 = vmatprep.subr.bf16.mxu0 0
    %3019 = vmatpush1.bf16.msra.mxu0 %v2978
    %3020 = vmatprep.subr.bf16.mxu0 0
    %3021 = vmatpush1.bf16.msra.mxu0 %v2979
    %3022 = vmatprep.subr.bf16.mxu0 0
    %3023 = vmatpush1.bf16.msra.mxu0 %v2980
    %3024 = vmatprep.subr.bf16.mxu0 0
    %3025 = vmatpush1.bf16.msra.mxu0 %v2981
    %3026 = vmatprep.subr.bf16.mxu0 0
    %3027 = vmatpush1.bf16.msra.mxu0 %v2982
    %3028 = vmatprep.subr.bf16.mxu0 0
    %3029 = vmatpush1.bf16.msra.mxu0 %v2983
    %3030 = vmatprep.subr.bf16.mxu0 0
    %3031 = vmatpush1.bf16.msra.mxu0 %v2984
    %3032 = vmatprep.subr.bf16.mxu0 0
    %3033 = vmatpush1.bf16.msra.mxu0 %v2985
    %3034 = vmatprep.mubr.bf16.mxu0 %v2866
    %3035 = vmatmul.mubr.bf16.gmra.mrb[0].mxu0 %v2865
    %v3036 = vpop.f32.mrb[0].mxu0
    %v3037 = vadd.f32 %v2904, %v3036
    %v3038 = vpop.f32.mrb[0].mxu0
    %v3039 = vpop.f32.mrb[0].mxu0
    %v3040 = vpop.f32.mrb[0].mxu0
    %3041 = vdwg.mxu0
    %3042 = vst [vmem:[#allocation13] sm:$0xff] %v3037
    // Predicated region
    $region62: #{tpu_custom_call.1} parent=1 // pred_check
      _
    $region63: #{tpu_custom_call.1} parent=1 // pred_check_branch
      %3044 = sbr.rel (0) target = $region65
    $region64: #{tpu_custom_call.1} parent=1 // pred_region
      %s3046 = ssub.s32 128, 128
      %3047 = vsyncadd [#allocation4], %s3046
      %s3049 = sshll.u32 [#allocation13], 4
      %s3050 = int_to_ptr.vmem [resolvable:$true] %s3049
      %3052 = dma.vmem_to_hbm [thread:$0]  %s3050, 128, %s9, [#allocation4]
    $region65: #{tpu_custom_call.1} parent=1 // pred_fallthru
      _
    // Predicated region
    $region66: #{tpu_custom_call.1} parent=1 // pred_check
      _
    $region67: #{tpu_custom_call.1} parent=1 // pred_check_branch
      %3054 = sbr.rel (0) target = $region69
    $region68: #{tpu_custom_call.1} parent=1 // pred_region
      %3055 = dma.done [#allocation4], 128
    $region69: #{tpu_custom_call.1} parent=1 // pred_fallthru
      _
    %3056 = vsyncpa [#allocation3], 1
    %3057 = vsyncpa [#allocation6], 1
    %3058 = vsyncpa [#allocation9], 1
    %3059 = vsyncpa [#allocation12], 1
    %3060 = vsyncpa [#allocation4], 1

</llo_original>
